<compile_context>
chip_gen: v5e
topology: v5e:2x2
jax: 0.10.0
libtpu: 0.0.40
codegen_flags: <defaults>
</compile_context>

<pallas_src>
import jax
import jax.numpy as jnp
from jax import lax
from jax.experimental import pallas as pl
from jax.experimental.pallas import tpu as pltpu


def lstm_kernel(x_ref, wih_ref, whh_ref, b_ref, out_ref, gx_scr, h_scr, c_scr):
    """One (batch_chunk, time_chunk) grid step of the LSTM recurrence.

    x_ref   : (tc, Bc, D)   bf16  time-major input chunk
    wih_ref : (D, 4H)       bf16  resident input-projection weights, columns [i|f|g|o]
    whh_ref : (H, 4H)       bf16  resident recurrent weights,        columns [i|f|g|o]
    b_ref   : (1, 4H)       f32   b_ih + b_hh
    out_ref : (Bc, tc, H)         batch-major output chunk (no wrapper transpose needed)
    gx_scr  : (tc, Bc, 4H)  f32   hoisted input projection for this chunk
    h_scr/c_scr : (Bc, H)   f32   recurrent state, persists across time chunks
    """
    tc = x_ref.shape[0]
    H = h_scr.shape[-1]
    unroll = min(8, tc)   # bounded unroll: avoid blowing the 64-vreg file at large Bc*H

    # Reset recurrent state at the first time chunk of each batch chunk (h0 = c0 = 0).
    @pl.when(pl.program_id(1) == 0)
    def _():
        h_scr[...] = jnp.zeros_like(h_scr)
        c_scr[...] = jnp.zeros_like(c_scr)

    # ---- Hoisted input projection for the whole chunk (off the serial critical path).
    # Independent per-timestep (Bc, D) @ (D, 4H) matmuls pipeline back-to-back on the MXU.
    # TODO(synk): when Bc % 8 == 0, fuse these into one (tc*Bc, D) @ (D, 4H) matmul
    # (layout-free reshape) for better MXU utilization at production sizes.
    def proj(tt, carry):
        gx_scr[tt] = (
            jnp.dot(x_ref[tt], wih_ref[...], preferred_element_type=jnp.float32)
            + b_ref[...]
        )
        return carry

    lax.fori_loop(0, tc, proj, 0, unroll=unroll)

    # ---- Serial recurrence: ONE fused (Bc, H) @ (H, 4H) matmul per timestep.
    def step(tt, carry):
        h_prev = h_scr[...]                           # (Bc, H) f32
        c_prev = c_scr[...]                           # (Bc, H) f32
        # NOTE: h is re-quantized to bf16 at the MXU input each step; keep f32
        # (3-pass MXU) instead if accuracy at very long T requires it.
        rec = jnp.dot(h_prev.astype(whh_ref.dtype), whh_ref[...],
                      preferred_element_type=jnp.float32)          # (Bc, 4H)
        gates = gx_scr[tt] + rec                      # (Bc, 4H) f32

        # sigmoid(x) = 0.5 + 0.5*tanh(0.5*x): one EUP op per gate instead of exp+recip.
        i_g = 0.5 + 0.5 * jnp.tanh(0.5 * gates[:, 0 * H:1 * H])
        f_g = 0.5 + 0.5 * jnp.tanh(0.5 * gates[:, 1 * H:2 * H])
        g_g = jnp.tanh(gates[:, 2 * H:3 * H])
        o_g = 0.5 + 0.5 * jnp.tanh(0.5 * gates[:, 3 * H:4 * H])

        c_new = f_g * c_prev + i_g * g_g
        h_new = o_g * jnp.tanh(c_new)

        c_scr[...] = c_new
        h_scr[...] = h_new
        out_ref[:, tt, :] = h_new.astype(out_ref.dtype)   # batch-major writeback
        return carry

    lax.fori_loop(0, tc, step, 0, unroll=unroll)


def contextual_embedding_forward(x, w_ih, w_hh, b_ih, b_hh, *,
                                 time_chunk=32, batch_chunks=1,
                                 mxu_dtype=jnp.bfloat16,
                                 vmem_limit_bytes=None):
    """x: (B, T, D) batch_first, like PyTorch nn.LSTM.  Returns (B, T, H).

    batch_chunks: keep 1 on v5e/v6e (single TensorCore -> splitting only shrinks the
      already M-starved matmul).  On v7x use 2 only when B >= 16 so each core keeps
      Bc >= 8 (one sublane tile).
    time_chunk: sweep per generation -- v5e/v6e have 128 MiB VMEM, v7x only 64 MiB;
      cap at ~8-16 for large H on v7x and pass vmem_limit_bytes explicitly.
    """
    B, T, D = x.shape
    H = w_ih.shape[0] // 4
    assert B % batch_chunks == 0, "batch_chunks must divide B"
    Bc = B // batch_chunks
    if batch_chunks > 1:
        # (8,128) tiling rule: a blocked (non-full) batch dim must be a multiple of 8.
        assert Bc % 8 == 0, "with batch_chunks > 1, B/batch_chunks must be a multiple of 8"

    if T <= time_chunk:
        tc, n_chunks, T_pad = T, 1, T
    else:
        assert time_chunk % 8 == 0, "time_chunk must be a multiple of 8"
        tc = time_chunk
        n_chunks = pl.cdiv(T, tc)
        T_pad = n_chunks * tc
    # NOTE: for production sizes prefer D and H multiples of 128 (256 on v6e/v7x) and
    # Bc a multiple of 8, so all tiles are lane/sublane dense (no masked partial stores).

    # Time-major bf16 input stream (2*B*T*D bytes).  The (T,4,B,H) f32 gx intermediate
    # of the previous version is gone -- the input projection now lives in the kernel.
    xt = jnp.transpose(x, (1, 0, 2)).astype(mxu_dtype)              # (T, B, D)
    if T_pad != T:
        # Recurrence runs through zero-padded steps at the END of the sweep only; the
        # padded outputs are sliced off below (final h/c state is not exposed).
        xt = jnp.pad(xt, ((0, T_pad - T), (0, 0), (0, 0)))

    # Weights with all four gates concatenated along the lane dim: columns = [i|f|g|o].
    wih_r = jnp.transpose(w_ih).astype(mxu_dtype)                   # (D, 4H)
    whh_r = jnp.transpose(w_hh).astype(mxu_dtype)                   # (H, 4H)
    bias = (b_ih + b_hh).astype(jnp.float32).reshape(1, 4 * H)      # (1, 4H)

    out_dtype = x.dtype
    cost = pl.CostEstimate(
        flops=int(2 * B * T_pad * 4 * H * (D + H)),
        transcendentals=int(5 * B * T_pad * H),
        bytes_accessed=int(
            B * T_pad * D * 2                                   # x (bf16)
            + B * T_pad * H * jnp.dtype(out_dtype).itemsize     # out
            + ((D + H) * 4 * H) * 2 + 4 * H * 4                 # weights + bias
        ),
    )

    out = pl.pallas_call(
        lstm_kernel,
        out_shape=jax.ShapeDtypeStruct((B, T_pad, H), out_dtype),
        grid_spec=pltpu.PrefetchScalarGridSpec(
            num_scalar_prefetch=0,
            grid=(batch_chunks, n_chunks),
            in_specs=[
                # time-major input chunk
                pl.BlockSpec((tc, Bc, D), lambda bc, c: (c, bc, 0)),
                # resident weights / bias (constant index map -> fetched once).
                # TODO(synk): add pipeline_mode=pl.Buffered(1) on these to reclaim the
                # redundant second weight buffer (matters most on v7x's 64 MiB VMEM).
                pl.BlockSpec((D, 4 * H), lambda bc, c: (0, 0)),
                pl.BlockSpec((H, 4 * H), lambda bc, c: (0, 0)),
                pl.BlockSpec((1, 4 * H), lambda bc, c: (0, 0)),
            ],
            # Batch-major output block: no extra wrapper transpose pass over B*T*H.
            out_specs=pl.BlockSpec((Bc, tc, H), lambda bc, c: (bc, c, 0)),
            scratch_shapes=[
                pltpu.VMEM((tc, Bc, 4 * H), jnp.float32),   # hoisted x-projection
                pltpu.VMEM((Bc, H), jnp.float32),           # h state
                pltpu.VMEM((Bc, H), jnp.float32),           # c state
            ],
        ),
        compiler_params=pltpu.CompilerParams(
            # Batch chunks are independent recurrences (megacore on v7x); the time axis
            # is a sequential recurrence -> "arbitrary".
            dimension_semantics=("parallel", "arbitrary"),
            vmem_limit_bytes=vmem_limit_bytes,
        ),
        cost_estimate=cost,
    )(xt, wih_r, whh_r, bias)

    return out[:, :T, :]


def lstm_reference(x, w_ih, w_hh, b_ih, b_hh):
    """Pure-JAX f32 reference matching PyTorch nn.LSTM forward (batch_first)."""
    B, T, D = x.shape
    H = w_ih.shape[0] // 4
    b = b_ih + b_hh

    def step(carry, x_t):
        h, c = carry
        gates = x_t @ w_ih.T + h @ w_hh.T + b
        i = jax.nn.sigmoid(gates[:, 0 * H:1 * H])
        f = jax.nn.sigmoid(gates[:, 1 * H:2 * H])
        g = jnp.tanh(gates[:, 2 * H:3 * H])
        o = jax.nn.sigmoid(gates[:, 3 * H:4 * H])
        c = f * c + i * g
        h = o * jnp.tanh(c)
        return (h, c), h

    h0 = jnp.zeros((B, H), jnp.float32)
    c0 = jnp.zeros((B, H), jnp.float32)
    _, hs = jax.lax.scan(step, (h0, c0), jnp.transpose(x, (1, 0, 2)))
    return jnp.transpose(hs, (1, 0, 2))


if __name__ == "__main__":
    B, T, D, H = 2, 8, 16, 32

    key = jax.random.PRNGKey(0)
    kx, k1, k2, k3, k4 = jax.random.split(key, 5)

    # Deterministic synthetic parameters (PyTorch LSTM shapes / init range).
    scale = 1.0 / jnp.sqrt(jnp.float32(H))
    x = jax.random.normal(kx, (B, T, D), jnp.float32)
    w_ih = jax.random.uniform(k1, (4 * H, D), jnp.float32, -scale, scale)
    w_hh = jax.random.uniform(k2, (4 * H, H), jnp.float32, -scale, scale)
    b_ih = jax.random.uniform(k3, (4 * H,), jnp.float32, -scale, scale)
    b_hh = jax.random.uniform(k4, (4 * H,), jnp.float32, -scale, scale)

    out = contextual_embedding_forward(x, w_ih, w_hh, b_ih, b_hh)
    out = jax.block_until_ready(out)

    ref = lstm_reference(x, w_ih, w_hh, b_ih, b_hh)
    assert out.shape == (B, T, H)
    # bf16 MXU operands (f32 accumulate / f32 state) drift slightly from the f32 ref.
    assert jnp.allclose(out, ref, atol=2e-2, rtol=2e-2), "mismatch vs reference"

    print("KERNEL_OK")
</pallas_src>

<mosaic_0001>
module attributes {stable_mosaic.version = 11 : i64} {
  func.func @lstm_kernel(%arg0: i32, %arg1: i32, %arg2: memref<8x2x16xbf16, #tpu.memory_space<vmem>>, %arg3: memref<16x128xbf16, #tpu.memory_space<vmem>>, %arg4: memref<32x128xbf16, #tpu.memory_space<vmem>>, %arg5: memref<1x128xf32, #tpu.memory_space<vmem>>, %arg6: memref<2x8x32xf32, #tpu.memory_space<vmem>>, %arg7: memref<8x2x128xf32, #tpu.memory_space<vmem>>, %arg8: memref<2x32xf32, #tpu.memory_space<vmem>>, %arg9: memref<2x32xf32, #tpu.memory_space<vmem>>) attributes {dimension_semantics = [#tpu.dimension_semantics<parallel>, #tpu.dimension_semantics<arbitrary>], iteration_bounds = array<i64: 1, 1>, scalar_prefetch = 0 : i64, scratch_operands = 3 : i64, tpu.core_type = #tpu.core_type<tc>, window_params = [{transform_indices = @transform_0, window_bounds = array<i64: 8, 2, 16>}, {pipeline_mode = #tpu.pipeline_mode<synchronous>, transform_indices = @transform_1, window_bounds = array<i64: 16, 128>}, {pipeline_mode = #tpu.pipeline_mode<synchronous>, transform_indices = @transform_2, window_bounds = array<i64: 32, 128>}, {pipeline_mode = #tpu.pipeline_mode<synchronous>, transform_indices = @transform_3, window_bounds = array<i64: 1, 128>}, {transform_indices = @transform_4, window_bounds = array<i64: 2, 8, 32>}]} {
    %c0_i32 = arith.constant 0 : i32
    %0 = arith.cmpi eq, %arg1, %c0_i32 : i32
    %1 = arith.extui %0 : i1 to i32
    %c0_i32_0 = arith.constant 0 : i32
    %2 = arith.cmpi ne, %1, %c0_i32_0 : i32
    scf.if %2 {
      %cst_273 = arith.constant 0.000000e+00 : f32
      %467 = vector.broadcast %cst_273 : f32 to vector<2x32xf32>
      %c0_274 = arith.constant 0 : index
      %c0_275 = arith.constant 0 : index
      %468 = vector.load %arg8[%c0_274, %c0_275] : memref<2x32xf32, #tpu.memory_space<vmem>>, vector<2x32xf32>
      tpu.vector_store %arg8[%c0_274, %c0_275], %467 {strides = array<i32>} : memref<2x32xf32, #tpu.memory_space<vmem>>, vector<2x32xf32>,
      %cst_276 = arith.constant 0.000000e+00 : f32
      %469 = vector.broadcast %cst_276 : f32 to vector<2x32xf32>
      %c0_277 = arith.constant 0 : index
      %c0_278 = arith.constant 0 : index
      %470 = vector.load %arg9[%c0_277, %c0_278] : memref<2x32xf32, #tpu.memory_space<vmem>>, vector<2x32xf32>
      tpu.vector_store %arg9[%c0_277, %c0_278], %469 {strides = array<i32>} : memref<2x32xf32, #tpu.memory_space<vmem>>, vector<2x32xf32>,
    } else {
    }
    %c0_i32_1 = arith.constant 0 : i32
    %3 = arith.index_cast %c0_i32_1 : i32 to index
    %c0 = arith.constant 0 : index
    %c0_2 = arith.constant 0 : index
    %4 = vector.load %arg2[%3, %c0, %c0_2] : memref<8x2x16xbf16, #tpu.memory_space<vmem>>, vector<1x2x16xbf16>
    %5 = vector.shape_cast %4 : vector<1x2x16xbf16> to vector<2x16xbf16>
    %c0_3 = arith.constant 0 : index
    %c0_4 = arith.constant 0 : index
    %6 = vector.load %arg3[%c0_3, %c0_4] : memref<16x128xbf16, #tpu.memory_space<vmem>>, vector<16x128xbf16>
    %cst = arith.constant dense<0.000000e+00> : vector<2x128xf32>
    %7 = tpu.matmul %5, %6, %cst {dimension_numbers = #tpu.dot_dimension_numbers<[1], [0], [0], [1], [0, 0, 1, 1], [], []>} : vector<2x16xbf16>, vector<16x128xbf16>, vector<2x128xf32> -> vector<2x128xf32>
    %c0_5 = arith.constant 0 : index
    %c0_6 = arith.constant 0 : index
    %8 = vector.load %arg5[%c0_5, %c0_6] : memref<1x128xf32, #tpu.memory_space<vmem>>, vector<1x128xf32>
    %9 = vector.broadcast %8 : vector<1x128xf32> to vector<2x128xf32>
    %10 = arith.addf %7, %9 : vector<2x128xf32>
    %11 = arith.index_cast %c0_i32_1 : i32 to index
    %c0_7 = arith.constant 0 : index
    %c0_8 = arith.constant 0 : index
    %12 = vector.load %arg7[%11, %c0_7, %c0_8] : memref<8x2x128xf32, #tpu.memory_space<vmem>>, vector<1x2x128xf32>
    %13 = vector.shape_cast %12 : vector<1x2x128xf32> to vector<2x128xf32>
    %14 = vector.shape_cast %10 : vector<2x128xf32> to vector<1x2x128xf32>
    tpu.vector_store %arg7[%11, %c0_7, %c0_8], %14 {strides = array<i32>} : memref<8x2x128xf32, #tpu.memory_space<vmem>>, vector<1x2x128xf32>,
    %c1_i32 = arith.constant 1 : i32
    %15 = arith.index_cast %c1_i32 : i32 to index
    %c0_9 = arith.constant 0 : index
    %c0_10 = arith.constant 0 : index
    %16 = vector.load %arg2[%15, %c0_9, %c0_10] : memref<8x2x16xbf16, #tpu.memory_space<vmem>>, vector<1x2x16xbf16>
    %17 = vector.shape_cast %16 : vector<1x2x16xbf16> to vector<2x16xbf16>
    %c0_11 = arith.constant 0 : index
    %c0_12 = arith.constant 0 : index
    %18 = vector.load %arg3[%c0_11, %c0_12] : memref<16x128xbf16, #tpu.memory_space<vmem>>, vector<16x128xbf16>
    %cst_13 = arith.constant dense<0.000000e+00> : vector<2x128xf32>
    %19 = tpu.matmul %17, %18, %cst_13 {dimension_numbers = #tpu.dot_dimension_numbers<[1], [0], [0], [1], [0, 0, 1, 1], [], []>} : vector<2x16xbf16>, vector<16x128xbf16>, vector<2x128xf32> -> vector<2x128xf32>
    %c0_14 = arith.constant 0 : index
    %c0_15 = arith.constant 0 : index
    %20 = vector.load %arg5[%c0_14, %c0_15] : memref<1x128xf32, #tpu.memory_space<vmem>>, vector<1x128xf32>
    %21 = vector.broadcast %20 : vector<1x128xf32> to vector<2x128xf32>
    %22 = arith.addf %19, %21 : vector<2x128xf32>
    %23 = arith.index_cast %c1_i32 : i32 to index
    %c0_16 = arith.constant 0 : index
    %c0_17 = arith.constant 0 : index
    %24 = vector.load %arg7[%23, %c0_16, %c0_17] : memref<8x2x128xf32, #tpu.memory_space<vmem>>, vector<1x2x128xf32>
    %25 = vector.shape_cast %24 : vector<1x2x128xf32> to vector<2x128xf32>
    %26 = vector.shape_cast %22 : vector<2x128xf32> to vector<1x2x128xf32>
    tpu.vector_store %arg7[%23, %c0_16, %c0_17], %26 {strides = array<i32>} : memref<8x2x128xf32, #tpu.memory_space<vmem>>, vector<1x2x128xf32>,
    %c2_i32 = arith.constant 2 : i32
    %27 = arith.index_cast %c2_i32 : i32 to index
    %c0_18 = arith.constant 0 : index
    %c0_19 = arith.constant 0 : index
    %28 = vector.load %arg2[%27, %c0_18, %c0_19] : memref<8x2x16xbf16, #tpu.memory_space<vmem>>, vector<1x2x16xbf16>
    %29 = vector.shape_cast %28 : vector<1x2x16xbf16> to vector<2x16xbf16>
    %c0_20 = arith.constant 0 : index
    %c0_21 = arith.constant 0 : index
    %30 = vector.load %arg3[%c0_20, %c0_21] : memref<16x128xbf16, #tpu.memory_space<vmem>>, vector<16x128xbf16>
    %cst_22 = arith.constant dense<0.000000e+00> : vector<2x128xf32>
    %31 = tpu.matmul %29, %30, %cst_22 {dimension_numbers = #tpu.dot_dimension_numbers<[1], [0], [0], [1], [0, 0, 1, 1], [], []>} : vector<2x16xbf16>, vector<16x128xbf16>, vector<2x128xf32> -> vector<2x128xf32>
    %c0_23 = arith.constant 0 : index
    %c0_24 = arith.constant 0 : index
    %32 = vector.load %arg5[%c0_23, %c0_24] : memref<1x128xf32, #tpu.memory_space<vmem>>, vector<1x128xf32>
    %33 = vector.broadcast %32 : vector<1x128xf32> to vector<2x128xf32>
    %34 = arith.addf %31, %33 : vector<2x128xf32>
    %35 = arith.index_cast %c2_i32 : i32 to index
    %c0_25 = arith.constant 0 : index
    %c0_26 = arith.constant 0 : index
    %36 = vector.load %arg7[%35, %c0_25, %c0_26] : memref<8x2x128xf32, #tpu.memory_space<vmem>>, vector<1x2x128xf32>
    %37 = vector.shape_cast %36 : vector<1x2x128xf32> to vector<2x128xf32>
    %38 = vector.shape_cast %34 : vector<2x128xf32> to vector<1x2x128xf32>
    tpu.vector_store %arg7[%35, %c0_25, %c0_26], %38 {strides = array<i32>} : memref<8x2x128xf32, #tpu.memory_space<vmem>>, vector<1x2x128xf32>,
    %c3_i32 = arith.constant 3 : i32
    %39 = arith.index_cast %c3_i32 : i32 to index
    %c0_27 = arith.constant 0 : index
    %c0_28 = arith.constant 0 : index
    %40 = vector.load %arg2[%39, %c0_27, %c0_28] : memref<8x2x16xbf16, #tpu.memory_space<vmem>>, vector<1x2x16xbf16>
    %41 = vector.shape_cast %40 : vector<1x2x16xbf16> to vector<2x16xbf16>
    %c0_29 = arith.constant 0 : index
    %c0_30 = arith.constant 0 : index
    %42 = vector.load %arg3[%c0_29, %c0_30] : memref<16x128xbf16, #tpu.memory_space<vmem>>, vector<16x128xbf16>
    %cst_31 = arith.constant dense<0.000000e+00> : vector<2x128xf32>
    %43 = tpu.matmul %41, %42, %cst_31 {dimension_numbers = #tpu.dot_dimension_numbers<[1], [0], [0], [1], [0, 0, 1, 1], [], []>} : vector<2x16xbf16>, vector<16x128xbf16>, vector<2x128xf32> -> vector<2x128xf32>
    %c0_32 = arith.constant 0 : index
    %c0_33 = arith.constant 0 : index
    %44 = vector.load %arg5[%c0_32, %c0_33] : memref<1x128xf32, #tpu.memory_space<vmem>>, vector<1x128xf32>
    %45 = vector.broadcast %44 : vector<1x128xf32> to vector<2x128xf32>
    %46 = arith.addf %43, %45 : vector<2x128xf32>
    %47 = arith.index_cast %c3_i32 : i32 to index
    %c0_34 = arith.constant 0 : index
    %c0_35 = arith.constant 0 : index
    %48 = vector.load %arg7[%47, %c0_34, %c0_35] : memref<8x2x128xf32, #tpu.memory_space<vmem>>, vector<1x2x128xf32>
    %49 = vector.shape_cast %48 : vector<1x2x128xf32> to vector<2x128xf32>
    %50 = vector.shape_cast %46 : vector<2x128xf32> to vector<1x2x128xf32>
    tpu.vector_store %arg7[%47, %c0_34, %c0_35], %50 {strides = array<i32>} : memref<8x2x128xf32, #tpu.memory_space<vmem>>, vector<1x2x128xf32>,
    %c4_i32 = arith.constant 4 : i32
    %51 = arith.index_cast %c4_i32 : i32 to index
    %c0_36 = arith.constant 0 : index
    %c0_37 = arith.constant 0 : index
    %52 = vector.load %arg2[%51, %c0_36, %c0_37] : memref<8x2x16xbf16, #tpu.memory_space<vmem>>, vector<1x2x16xbf16>
    %53 = vector.shape_cast %52 : vector<1x2x16xbf16> to vector<2x16xbf16>
    %c0_38 = arith.constant 0 : index
    %c0_39 = arith.constant 0 : index
    %54 = vector.load %arg3[%c0_38, %c0_39] : memref<16x128xbf16, #tpu.memory_space<vmem>>, vector<16x128xbf16>
    %cst_40 = arith.constant dense<0.000000e+00> : vector<2x128xf32>
    %55 = tpu.matmul %53, %54, %cst_40 {dimension_numbers = #tpu.dot_dimension_numbers<[1], [0], [0], [1], [0, 0, 1, 1], [], []>} : vector<2x16xbf16>, vector<16x128xbf16>, vector<2x128xf32> -> vector<2x128xf32>
    %c0_41 = arith.constant 0 : index
    %c0_42 = arith.constant 0 : index
    %56 = vector.load %arg5[%c0_41, %c0_42] : memref<1x128xf32, #tpu.memory_space<vmem>>, vector<1x128xf32>
    %57 = vector.broadcast %56 : vector<1x128xf32> to vector<2x128xf32>
    %58 = arith.addf %55, %57 : vector<2x128xf32>
    %59 = arith.index_cast %c4_i32 : i32 to index
    %c0_43 = arith.constant 0 : index
    %c0_44 = arith.constant 0 : index
    %60 = vector.load %arg7[%59, %c0_43, %c0_44] : memref<8x2x128xf32, #tpu.memory_space<vmem>>, vector<1x2x128xf32>
    %61 = vector.shape_cast %60 : vector<1x2x128xf32> to vector<2x128xf32>
    %62 = vector.shape_cast %58 : vector<2x128xf32> to vector<1x2x128xf32>
    tpu.vector_store %arg7[%59, %c0_43, %c0_44], %62 {strides = array<i32>} : memref<8x2x128xf32, #tpu.memory_space<vmem>>, vector<1x2x128xf32>,
    %c5_i32 = arith.constant 5 : i32
    %63 = arith.index_cast %c5_i32 : i32 to index
    %c0_45 = arith.constant 0 : index
    %c0_46 = arith.constant 0 : index
    %64 = vector.load %arg2[%63, %c0_45, %c0_46] : memref<8x2x16xbf16, #tpu.memory_space<vmem>>, vector<1x2x16xbf16>
    %65 = vector.shape_cast %64 : vector<1x2x16xbf16> to vector<2x16xbf16>
    %c0_47 = arith.constant 0 : index
    %c0_48 = arith.constant 0 : index
    %66 = vector.load %arg3[%c0_47, %c0_48] : memref<16x128xbf16, #tpu.memory_space<vmem>>, vector<16x128xbf16>
    %cst_49 = arith.constant dense<0.000000e+00> : vector<2x128xf32>
    %67 = tpu.matmul %65, %66, %cst_49 {dimension_numbers = #tpu.dot_dimension_numbers<[1], [0], [0], [1], [0, 0, 1, 1], [], []>} : vector<2x16xbf16>, vector<16x128xbf16>, vector<2x128xf32> -> vector<2x128xf32>
    %c0_50 = arith.constant 0 : index
    %c0_51 = arith.constant 0 : index
    %68 = vector.load %arg5[%c0_50, %c0_51] : memref<1x128xf32, #tpu.memory_space<vmem>>, vector<1x128xf32>
    %69 = vector.broadcast %68 : vector<1x128xf32> to vector<2x128xf32>
    %70 = arith.addf %67, %69 : vector<2x128xf32>
    %71 = arith.index_cast %c5_i32 : i32 to index
    %c0_52 = arith.constant 0 : index
    %c0_53 = arith.constant 0 : index
    %72 = vector.load %arg7[%71, %c0_52, %c0_53] : memref<8x2x128xf32, #tpu.memory_space<vmem>>, vector<1x2x128xf32>
    %73 = vector.shape_cast %72 : vector<1x2x128xf32> to vector<2x128xf32>
    %74 = vector.shape_cast %70 : vector<2x128xf32> to vector<1x2x128xf32>
    tpu.vector_store %arg7[%71, %c0_52, %c0_53], %74 {strides = array<i32>} : memref<8x2x128xf32, #tpu.memory_space<vmem>>, vector<1x2x128xf32>,
    %c6_i32 = arith.constant 6 : i32
    %75 = arith.index_cast %c6_i32 : i32 to index
    %c0_54 = arith.constant 0 : index
    %c0_55 = arith.constant 0 : index
    %76 = vector.load %arg2[%75, %c0_54, %c0_55] : memref<8x2x16xbf16, #tpu.memory_space<vmem>>, vector<1x2x16xbf16>
    %77 = vector.shape_cast %76 : vector<1x2x16xbf16> to vector<2x16xbf16>
    %c0_56 = arith.constant 0 : index
    %c0_57 = arith.constant 0 : index
    %78 = vector.load %arg3[%c0_56, %c0_57] : memref<16x128xbf16, #tpu.memory_space<vmem>>, vector<16x128xbf16>
    %cst_58 = arith.constant dense<0.000000e+00> : vector<2x128xf32>
    %79 = tpu.matmul %77, %78, %cst_58 {dimension_numbers = #tpu.dot_dimension_numbers<[1], [0], [0], [1], [0, 0, 1, 1], [], []>} : vector<2x16xbf16>, vector<16x128xbf16>, vector<2x128xf32> -> vector<2x128xf32>
    %c0_59 = arith.constant 0 : index
    %c0_60 = arith.constant 0 : index
    %80 = vector.load %arg5[%c0_59, %c0_60] : memref<1x128xf32, #tpu.memory_space<vmem>>, vector<1x128xf32>
    %81 = vector.broadcast %80 : vector<1x128xf32> to vector<2x128xf32>
    %82 = arith.addf %79, %81 : vector<2x128xf32>
    %83 = arith.index_cast %c6_i32 : i32 to index
    %c0_61 = arith.constant 0 : index
    %c0_62 = arith.constant 0 : index
    %84 = vector.load %arg7[%83, %c0_61, %c0_62] : memref<8x2x128xf32, #tpu.memory_space<vmem>>, vector<1x2x128xf32>
    %85 = vector.shape_cast %84 : vector<1x2x128xf32> to vector<2x128xf32>
    %86 = vector.shape_cast %82 : vector<2x128xf32> to vector<1x2x128xf32>
    tpu.vector_store %arg7[%83, %c0_61, %c0_62], %86 {strides = array<i32>} : memref<8x2x128xf32, #tpu.memory_space<vmem>>, vector<1x2x128xf32>,
    %c7_i32 = arith.constant 7 : i32
    %87 = arith.index_cast %c7_i32 : i32 to index
    %c0_63 = arith.constant 0 : index
    %c0_64 = arith.constant 0 : index
    %88 = vector.load %arg2[%87, %c0_63, %c0_64] : memref<8x2x16xbf16, #tpu.memory_space<vmem>>, vector<1x2x16xbf16>
    %89 = vector.shape_cast %88 : vector<1x2x16xbf16> to vector<2x16xbf16>
    %c0_65 = arith.constant 0 : index
    %c0_66 = arith.constant 0 : index
    %90 = vector.load %arg3[%c0_65, %c0_66] : memref<16x128xbf16, #tpu.memory_space<vmem>>, vector<16x128xbf16>
    %cst_67 = arith.constant dense<0.000000e+00> : vector<2x128xf32>
    %91 = tpu.matmul %89, %90, %cst_67 {dimension_numbers = #tpu.dot_dimension_numbers<[1], [0], [0], [1], [0, 0, 1, 1], [], []>} : vector<2x16xbf16>, vector<16x128xbf16>, vector<2x128xf32> -> vector<2x128xf32>
    %c0_68 = arith.constant 0 : index
    %c0_69 = arith.constant 0 : index
    %92 = vector.load %arg5[%c0_68, %c0_69] : memref<1x128xf32, #tpu.memory_space<vmem>>, vector<1x128xf32>
    %93 = vector.broadcast %92 : vector<1x128xf32> to vector<2x128xf32>
    %94 = arith.addf %91, %93 : vector<2x128xf32>
    %95 = arith.index_cast %c7_i32 : i32 to index
    %c0_70 = arith.constant 0 : index
    %c0_71 = arith.constant 0 : index
    %96 = vector.load %arg7[%95, %c0_70, %c0_71] : memref<8x2x128xf32, #tpu.memory_space<vmem>>, vector<1x2x128xf32>
    %97 = vector.shape_cast %96 : vector<1x2x128xf32> to vector<2x128xf32>
    %98 = vector.shape_cast %94 : vector<2x128xf32> to vector<1x2x128xf32>
    tpu.vector_store %arg7[%95, %c0_70, %c0_71], %98 {strides = array<i32>} : memref<8x2x128xf32, #tpu.memory_space<vmem>>, vector<1x2x128xf32>,
    %c8_i32 = arith.constant 8 : i32
    %c0_i32_72 = arith.constant 0 : i32
    %c0_73 = arith.constant 0 : index
    %c0_74 = arith.constant 0 : index
    %99 = vector.load %arg8[%c0_73, %c0_74] : memref<2x32xf32, #tpu.memory_space<vmem>>, vector<2x32xf32>
    %c0_75 = arith.constant 0 : index
    %c0_76 = arith.constant 0 : index
    %100 = vector.load %arg9[%c0_75, %c0_76] : memref<2x32xf32, #tpu.memory_space<vmem>>, vector<2x32xf32>
    %101 = arith.truncf %99 : vector<2x32xf32> to vector<2x32xbf16>
    %c0_77 = arith.constant 0 : index
    %c0_78 = arith.constant 0 : index
    %102 = vector.load %arg4[%c0_77, %c0_78] : memref<32x128xbf16, #tpu.memory_space<vmem>>, vector<32x128xbf16>
    %cst_79 = arith.constant dense<0.000000e+00> : vector<2x128xf32>
    %103 = tpu.matmul %101, %102, %cst_79 {dimension_numbers = #tpu.dot_dimension_numbers<[1], [0], [0], [1], [0, 0, 1, 1], [], []>} : vector<2x32xbf16>, vector<32x128xbf16>, vector<2x128xf32> -> vector<2x128xf32>
    %104 = arith.index_cast %c0_i32_72 : i32 to index
    %c0_80 = arith.constant 0 : index
    %c0_81 = arith.constant 0 : index
    %105 = vector.load %arg7[%104, %c0_80, %c0_81] : memref<8x2x128xf32, #tpu.memory_space<vmem>>, vector<1x2x128xf32>
    %106 = vector.shape_cast %105 : vector<1x2x128xf32> to vector<2x128xf32>
    %107 = arith.addf %106, %103 : vector<2x128xf32>
    %108 = vector.extract_strided_slice %107 {offsets = [0, 0], sizes = [2, 32], strides = [1, 1]} : vector<2x128xf32> to vector<2x32xf32>
    %cst_82 = arith.constant 5.000000e-01 : f32
    %109 = vector.broadcast %cst_82 : f32 to vector<2x32xf32>
    %110 = arith.mulf %109, %108 : vector<2x32xf32>
    %111 = math.tanh %110 : vector<2x32xf32>
    %cst_83 = arith.constant 5.000000e-01 : f32
    %112 = vector.broadcast %cst_83 : f32 to vector<2x32xf32>
    %113 = arith.mulf %112, %111 : vector<2x32xf32>
    %cst_84 = arith.constant 5.000000e-01 : f32
    %114 = vector.broadcast %cst_84 : f32 to vector<2x32xf32>
    %115 = arith.addf %114, %113 : vector<2x32xf32>
    %116 = vector.extract_strided_slice %107 {offsets = [0, 32], sizes = [2, 32], strides = [1, 1]} : vector<2x128xf32> to vector<2x32xf32>
    %cst_85 = arith.constant 5.000000e-01 : f32
    %117 = vector.broadcast %cst_85 : f32 to vector<2x32xf32>
    %118 = arith.mulf %117, %116 : vector<2x32xf32>
    %119 = math.tanh %118 : vector<2x32xf32>
    %cst_86 = arith.constant 5.000000e-01 : f32
    %120 = vector.broadcast %cst_86 : f32 to vector<2x32xf32>
    %121 = arith.mulf %120, %119 : vector<2x32xf32>
    %cst_87 = arith.constant 5.000000e-01 : f32
    %122 = vector.broadcast %cst_87 : f32 to vector<2x32xf32>
    %123 = arith.addf %122, %121 : vector<2x32xf32>
    %124 = vector.extract_strided_slice %107 {offsets = [0, 64], sizes = [2, 32], strides = [1, 1]} : vector<2x128xf32> to vector<2x32xf32>
    %125 = math.tanh %124 : vector<2x32xf32>
    %126 = vector.extract_strided_slice %107 {offsets = [0, 96], sizes = [2, 32], strides = [1, 1]} : vector<2x128xf32> to vector<2x32xf32>
    %cst_88 = arith.constant 5.000000e-01 : f32
    %127 = vector.broadcast %cst_88 : f32 to vector<2x32xf32>
    %128 = arith.mulf %127, %126 : vector<2x32xf32>
    %129 = math.tanh %128 : vector<2x32xf32>
    %cst_89 = arith.constant 5.000000e-01 : f32
    %130 = vector.broadcast %cst_89 : f32 to vector<2x32xf32>
    %131 = arith.mulf %130, %129 : vector<2x32xf32>
    %cst_90 = arith.constant 5.000000e-01 : f32
    %132 = vector.broadcast %cst_90 : f32 to vector<2x32xf32>
    %133 = arith.addf %132, %131 : vector<2x32xf32>
    %134 = arith.mulf %123, %100 : vector<2x32xf32>
    %135 = arith.mulf %115, %125 : vector<2x32xf32>
    %136 = arith.addf %134, %135 : vector<2x32xf32>
    %137 = math.tanh %136 : vector<2x32xf32>
    %138 = arith.mulf %133, %137 : vector<2x32xf32>
    %c0_91 = arith.constant 0 : index
    %c0_92 = arith.constant 0 : index
    %139 = vector.load %arg9[%c0_91, %c0_92] : memref<2x32xf32, #tpu.memory_space<vmem>>, vector<2x32xf32>
    tpu.vector_store %arg9[%c0_91, %c0_92], %136 {strides = array<i32>} : memref<2x32xf32, #tpu.memory_space<vmem>>, vector<2x32xf32>,
    %c0_93 = arith.constant 0 : index
    %c0_94 = arith.constant 0 : index
    %140 = vector.load %arg8[%c0_93, %c0_94] : memref<2x32xf32, #tpu.memory_space<vmem>>, vector<2x32xf32>
    tpu.vector_store %arg8[%c0_93, %c0_94], %138 {strides = array<i32>} : memref<2x32xf32, #tpu.memory_space<vmem>>, vector<2x32xf32>,
    %c0_95 = arith.constant 0 : index
    %141 = arith.index_cast %c0_i32_72 : i32 to index
    %c0_96 = arith.constant 0 : index
    %142 = vector.load %arg6[%c0_95, %141, %c0_96] : memref<2x8x32xf32, #tpu.memory_space<vmem>>, vector<2x1x32xf32>
    %143 = vector.shape_cast %142 : vector<2x1x32xf32> to vector<2x32xf32>
    %144 = vector.shape_cast %138 : vector<2x32xf32> to vector<2x1x32xf32>
    tpu.vector_store %arg6[%c0_95, %141, %c0_96], %144 {strides = array<i32>} : memref<2x8x32xf32, #tpu.memory_space<vmem>>, vector<2x1x32xf32>,
    %c1_i32_97 = arith.constant 1 : i32
    %c0_98 = arith.constant 0 : index
    %c0_99 = arith.constant 0 : index
    %145 = vector.load %arg8[%c0_98, %c0_99] : memref<2x32xf32, #tpu.memory_space<vmem>>, vector<2x32xf32>
    %c0_100 = arith.constant 0 : index
    %c0_101 = arith.constant 0 : index
    %146 = vector.load %arg9[%c0_100, %c0_101] : memref<2x32xf32, #tpu.memory_space<vmem>>, vector<2x32xf32>
    %147 = arith.truncf %145 : vector<2x32xf32> to vector<2x32xbf16>
    %c0_102 = arith.constant 0 : index
    %c0_103 = arith.constant 0 : index
    %148 = vector.load %arg4[%c0_102, %c0_103] : memref<32x128xbf16, #tpu.memory_space<vmem>>, vector<32x128xbf16>
    %cst_104 = arith.constant dense<0.000000e+00> : vector<2x128xf32>
    %149 = tpu.matmul %147, %148, %cst_104 {dimension_numbers = #tpu.dot_dimension_numbers<[1], [0], [0], [1], [0, 0, 1, 1], [], []>} : vector<2x32xbf16>, vector<32x128xbf16>, vector<2x128xf32> -> vector<2x128xf32>
    %150 = arith.index_cast %c1_i32_97 : i32 to index
    %c0_105 = arith.constant 0 : index
    %c0_106 = arith.constant 0 : index
    %151 = vector.load %arg7[%150, %c0_105, %c0_106] : memref<8x2x128xf32, #tpu.memory_space<vmem>>, vector<1x2x128xf32>
    %152 = vector.shape_cast %151 : vector<1x2x128xf32> to vector<2x128xf32>
    %153 = arith.addf %152, %149 : vector<2x128xf32>
    %154 = vector.extract_strided_slice %153 {offsets = [0, 0], sizes = [2, 32], strides = [1, 1]} : vector<2x128xf32> to vector<2x32xf32>
    %cst_107 = arith.constant 5.000000e-01 : f32
    %155 = vector.broadcast %cst_107 : f32 to vector<2x32xf32>
    %156 = arith.mulf %155, %154 : vector<2x32xf32>
    %157 = math.tanh %156 : vector<2x32xf32>
    %cst_108 = arith.constant 5.000000e-01 : f32
    %158 = vector.broadcast %cst_108 : f32 to vector<2x32xf32>
    %159 = arith.mulf %158, %157 : vector<2x32xf32>
    %cst_109 = arith.constant 5.000000e-01 : f32
    %160 = vector.broadcast %cst_109 : f32 to vector<2x32xf32>
    %161 = arith.addf %160, %159 : vector<2x32xf32>
    %162 = vector.extract_strided_slice %153 {offsets = [0, 32], sizes = [2, 32], strides = [1, 1]} : vector<2x128xf32> to vector<2x32xf32>
    %cst_110 = arith.constant 5.000000e-01 : f32
    %163 = vector.broadcast %cst_110 : f32 to vector<2x32xf32>
    %164 = arith.mulf %163, %162 : vector<2x32xf32>
    %165 = math.tanh %164 : vector<2x32xf32>
    %cst_111 = arith.constant 5.000000e-01 : f32
    %166 = vector.broadcast %cst_111 : f32 to vector<2x32xf32>
    %167 = arith.mulf %166, %165 : vector<2x32xf32>
    %cst_112 = arith.constant 5.000000e-01 : f32
    %168 = vector.broadcast %cst_112 : f32 to vector<2x32xf32>
    %169 = arith.addf %168, %167 : vector<2x32xf32>
    %170 = vector.extract_strided_slice %153 {offsets = [0, 64], sizes = [2, 32], strides = [1, 1]} : vector<2x128xf32> to vector<2x32xf32>
    %171 = math.tanh %170 : vector<2x32xf32>
    %172 = vector.extract_strided_slice %153 {offsets = [0, 96], sizes = [2, 32], strides = [1, 1]} : vector<2x128xf32> to vector<2x32xf32>
    %cst_113 = arith.constant 5.000000e-01 : f32
    %173 = vector.broadcast %cst_113 : f32 to vector<2x32xf32>
    %174 = arith.mulf %173, %172 : vector<2x32xf32>
    %175 = math.tanh %174 : vector<2x32xf32>
    %cst_114 = arith.constant 5.000000e-01 : f32
    %176 = vector.broadcast %cst_114 : f32 to vector<2x32xf32>
    %177 = arith.mulf %176, %175 : vector<2x32xf32>
    %cst_115 = arith.constant 5.000000e-01 : f32
    %178 = vector.broadcast %cst_115 : f32 to vector<2x32xf32>
    %179 = arith.addf %178, %177 : vector<2x32xf32>
    %180 = arith.mulf %169, %146 : vector<2x32xf32>
    %181 = arith.mulf %161, %171 : vector<2x32xf32>
    %182 = arith.addf %180, %181 : vector<2x32xf32>
    %183 = math.tanh %182 : vector<2x32xf32>
    %184 = arith.mulf %179, %183 : vector<2x32xf32>
    %c0_116 = arith.constant 0 : index
    %c0_117 = arith.constant 0 : index
    %185 = vector.load %arg9[%c0_116, %c0_117] : memref<2x32xf32, #tpu.memory_space<vmem>>, vector<2x32xf32>
    tpu.vector_store %arg9[%c0_116, %c0_117], %182 {strides = array<i32>} : memref<2x32xf32, #tpu.memory_space<vmem>>, vector<2x32xf32>,
    %c0_118 = arith.constant 0 : index
    %c0_119 = arith.constant 0 : index
    %186 = vector.load %arg8[%c0_118, %c0_119] : memref<2x32xf32, #tpu.memory_space<vmem>>, vector<2x32xf32>
    tpu.vector_store %arg8[%c0_118, %c0_119], %184 {strides = array<i32>} : memref<2x32xf32, #tpu.memory_space<vmem>>, vector<2x32xf32>,
    %c0_120 = arith.constant 0 : index
    %187 = arith.index_cast %c1_i32_97 : i32 to index
    %c0_121 = arith.constant 0 : index
    %188 = vector.load %arg6[%c0_120, %187, %c0_121] : memref<2x8x32xf32, #tpu.memory_space<vmem>>, vector<2x1x32xf32>
    %189 = vector.shape_cast %188 : vector<2x1x32xf32> to vector<2x32xf32>
    %190 = vector.shape_cast %184 : vector<2x32xf32> to vector<2x1x32xf32>
    tpu.vector_store %arg6[%c0_120, %187, %c0_121], %190 {strides = array<i32>} : memref<2x8x32xf32, #tpu.memory_space<vmem>>, vector<2x1x32xf32>,
    %c2_i32_122 = arith.constant 2 : i32
    %c0_123 = arith.constant 0 : index
    %c0_124 = arith.constant 0 : index
    %191 = vector.load %arg8[%c0_123, %c0_124] : memref<2x32xf32, #tpu.memory_space<vmem>>, vector<2x32xf32>
    %c0_125 = arith.constant 0 : index
    %c0_126 = arith.constant 0 : index
    %192 = vector.load %arg9[%c0_125, %c0_126] : memref<2x32xf32, #tpu.memory_space<vmem>>, vector<2x32xf32>
    %193 = arith.truncf %191 : vector<2x32xf32> to vector<2x32xbf16>
    %c0_127 = arith.constant 0 : index
    %c0_128 = arith.constant 0 : index
    %194 = vector.load %arg4[%c0_127, %c0_128] : memref<32x128xbf16, #tpu.memory_space<vmem>>, vector<32x128xbf16>
    %cst_129 = arith.constant dense<0.000000e+00> : vector<2x128xf32>
    %195 = tpu.matmul %193, %194, %cst_129 {dimension_numbers = #tpu.dot_dimension_numbers<[1], [0], [0], [1], [0, 0, 1, 1], [], []>} : vector<2x32xbf16>, vector<32x128xbf16>, vector<2x128xf32> -> vector<2x128xf32>
    %196 = arith.index_cast %c2_i32_122 : i32 to index
    %c0_130 = arith.constant 0 : index
    %c0_131 = arith.constant 0 : index
    %197 = vector.load %arg7[%196, %c0_130, %c0_131] : memref<8x2x128xf32, #tpu.memory_space<vmem>>, vector<1x2x128xf32>
    %198 = vector.shape_cast %197 : vector<1x2x128xf32> to vector<2x128xf32>
    %199 = arith.addf %198, %195 : vector<2x128xf32>
    %200 = vector.extract_strided_slice %199 {offsets = [0, 0], sizes = [2, 32], strides = [1, 1]} : vector<2x128xf32> to vector<2x32xf32>
    %cst_132 = arith.constant 5.000000e-01 : f32
    %201 = vector.broadcast %cst_132 : f32 to vector<2x32xf32>
    %202 = arith.mulf %201, %200 : vector<2x32xf32>
    %203 = math.tanh %202 : vector<2x32xf32>
    %cst_133 = arith.constant 5.000000e-01 : f32
    %204 = vector.broadcast %cst_133 : f32 to vector<2x32xf32>
    %205 = arith.mulf %204, %203 : vector<2x32xf32>
    %cst_134 = arith.constant 5.000000e-01 : f32
    %206 = vector.broadcast %cst_134 : f32 to vector<2x32xf32>
    %207 = arith.addf %206, %205 : vector<2x32xf32>
    %208 = vector.extract_strided_slice %199 {offsets = [0, 32], sizes = [2, 32], strides = [1, 1]} : vector<2x128xf32> to vector<2x32xf32>
    %cst_135 = arith.constant 5.000000e-01 : f32
    %209 = vector.broadcast %cst_135 : f32 to vector<2x32xf32>
    %210 = arith.mulf %209, %208 : vector<2x32xf32>
    %211 = math.tanh %210 : vector<2x32xf32>
    %cst_136 = arith.constant 5.000000e-01 : f32
    %212 = vector.broadcast %cst_136 : f32 to vector<2x32xf32>
    %213 = arith.mulf %212, %211 : vector<2x32xf32>
    %cst_137 = arith.constant 5.000000e-01 : f32
    %214 = vector.broadcast %cst_137 : f32 to vector<2x32xf32>
    %215 = arith.addf %214, %213 : vector<2x32xf32>
    %216 = vector.extract_strided_slice %199 {offsets = [0, 64], sizes = [2, 32], strides = [1, 1]} : vector<2x128xf32> to vector<2x32xf32>
    %217 = math.tanh %216 : vector<2x32xf32>
    %218 = vector.extract_strided_slice %199 {offsets = [0, 96], sizes = [2, 32], strides = [1, 1]} : vector<2x128xf32> to vector<2x32xf32>
    %cst_138 = arith.constant 5.000000e-01 : f32
    %219 = vector.broadcast %cst_138 : f32 to vector<2x32xf32>
    %220 = arith.mulf %219, %218 : vector<2x32xf32>
    %221 = math.tanh %220 : vector<2x32xf32>
    %cst_139 = arith.constant 5.000000e-01 : f32
    %222 = vector.broadcast %cst_139 : f32 to vector<2x32xf32>
    %223 = arith.mulf %222, %221 : vector<2x32xf32>
    %cst_140 = arith.constant 5.000000e-01 : f32
    %224 = vector.broadcast %cst_140 : f32 to vector<2x32xf32>
    %225 = arith.addf %224, %223 : vector<2x32xf32>
    %226 = arith.mulf %215, %192 : vector<2x32xf32>
    %227 = arith.mulf %207, %217 : vector<2x32xf32>
    %228 = arith.addf %226, %227 : vector<2x32xf32>
    %229 = math.tanh %228 : vector<2x32xf32>
    %230 = arith.mulf %225, %229 : vector<2x32xf32>
    %c0_141 = arith.constant 0 : index
    %c0_142 = arith.constant 0 : index
    %231 = vector.load %arg9[%c0_141, %c0_142] : memref<2x32xf32, #tpu.memory_space<vmem>>, vector<2x32xf32>
    tpu.vector_store %arg9[%c0_141, %c0_142], %228 {strides = array<i32>} : memref<2x32xf32, #tpu.memory_space<vmem>>, vector<2x32xf32>,
    %c0_143 = arith.constant 0 : index
    %c0_144 = arith.constant 0 : index
    %232 = vector.load %arg8[%c0_143, %c0_144] : memref<2x32xf32, #tpu.memory_space<vmem>>, vector<2x32xf32>
    tpu.vector_store %arg8[%c0_143, %c0_144], %230 {strides = array<i32>} : memref<2x32xf32, #tpu.memory_space<vmem>>, vector<2x32xf32>,
    %c0_145 = arith.constant 0 : index
    %233 = arith.index_cast %c2_i32_122 : i32 to index
    %c0_146 = arith.constant 0 : index
    %234 = vector.load %arg6[%c0_145, %233, %c0_146] : memref<2x8x32xf32, #tpu.memory_space<vmem>>, vector<2x1x32xf32>
    %235 = vector.shape_cast %234 : vector<2x1x32xf32> to vector<2x32xf32>
    %236 = vector.shape_cast %230 : vector<2x32xf32> to vector<2x1x32xf32>
    tpu.vector_store %arg6[%c0_145, %233, %c0_146], %236 {strides = array<i32>} : memref<2x8x32xf32, #tpu.memory_space<vmem>>, vector<2x1x32xf32>,
    %c3_i32_147 = arith.constant 3 : i32
    %c0_148 = arith.constant 0 : index
    %c0_149 = arith.constant 0 : index
    %237 = vector.load %arg8[%c0_148, %c0_149] : memref<2x32xf32, #tpu.memory_space<vmem>>, vector<2x32xf32>
    %c0_150 = arith.constant 0 : index
    %c0_151 = arith.constant 0 : index
    %238 = vector.load %arg9[%c0_150, %c0_151] : memref<2x32xf32, #tpu.memory_space<vmem>>, vector<2x32xf32>
    %239 = arith.truncf %237 : vector<2x32xf32> to vector<2x32xbf16>
    %c0_152 = arith.constant 0 : index
    %c0_153 = arith.constant 0 : index
    %240 = vector.load %arg4[%c0_152, %c0_153] : memref<32x128xbf16, #tpu.memory_space<vmem>>, vector<32x128xbf16>
    %cst_154 = arith.constant dense<0.000000e+00> : vector<2x128xf32>
    %241 = tpu.matmul %239, %240, %cst_154 {dimension_numbers = #tpu.dot_dimension_numbers<[1], [0], [0], [1], [0, 0, 1, 1], [], []>} : vector<2x32xbf16>, vector<32x128xbf16>, vector<2x128xf32> -> vector<2x128xf32>
    %242 = arith.index_cast %c3_i32_147 : i32 to index
    %c0_155 = arith.constant 0 : index
    %c0_156 = arith.constant 0 : index
    %243 = vector.load %arg7[%242, %c0_155, %c0_156] : memref<8x2x128xf32, #tpu.memory_space<vmem>>, vector<1x2x128xf32>
    %244 = vector.shape_cast %243 : vector<1x2x128xf32> to vector<2x128xf32>
    %245 = arith.addf %244, %241 : vector<2x128xf32>
    %246 = vector.extract_strided_slice %245 {offsets = [0, 0], sizes = [2, 32], strides = [1, 1]} : vector<2x128xf32> to vector<2x32xf32>
    %cst_157 = arith.constant 5.000000e-01 : f32
    %247 = vector.broadcast %cst_157 : f32 to vector<2x32xf32>
    %248 = arith.mulf %247, %246 : vector<2x32xf32>
    %249 = math.tanh %248 : vector<2x32xf32>
    %cst_158 = arith.constant 5.000000e-01 : f32
    %250 = vector.broadcast %cst_158 : f32 to vector<2x32xf32>
    %251 = arith.mulf %250, %249 : vector<2x32xf32>
    %cst_159 = arith.constant 5.000000e-01 : f32
    %252 = vector.broadcast %cst_159 : f32 to vector<2x32xf32>
    %253 = arith.addf %252, %251 : vector<2x32xf32>
    %254 = vector.extract_strided_slice %245 {offsets = [0, 32], sizes = [2, 32], strides = [1, 1]} : vector<2x128xf32> to vector<2x32xf32>
    %cst_160 = arith.constant 5.000000e-01 : f32
    %255 = vector.broadcast %cst_160 : f32 to vector<2x32xf32>
    %256 = arith.mulf %255, %254 : vector<2x32xf32>
    %257 = math.tanh %256 : vector<2x32xf32>
    %cst_161 = arith.constant 5.000000e-01 : f32
    %258 = vector.broadcast %cst_161 : f32 to vector<2x32xf32>
    %259 = arith.mulf %258, %257 : vector<2x32xf32>
    %cst_162 = arith.constant 5.000000e-01 : f32
    %260 = vector.broadcast %cst_162 : f32 to vector<2x32xf32>
    %261 = arith.addf %260, %259 : vector<2x32xf32>
    %262 = vector.extract_strided_slice %245 {offsets = [0, 64], sizes = [2, 32], strides = [1, 1]} : vector<2x128xf32> to vector<2x32xf32>
    %263 = math.tanh %262 : vector<2x32xf32>
    %264 = vector.extract_strided_slice %245 {offsets = [0, 96], sizes = [2, 32], strides = [1, 1]} : vector<2x128xf32> to vector<2x32xf32>
    %cst_163 = arith.constant 5.000000e-01 : f32
    %265 = vector.broadcast %cst_163 : f32 to vector<2x32xf32>
    %266 = arith.mulf %265, %264 : vector<2x32xf32>
    %267 = math.tanh %266 : vector<2x32xf32>
    %cst_164 = arith.constant 5.000000e-01 : f32
    %268 = vector.broadcast %cst_164 : f32 to vector<2x32xf32>
    %269 = arith.mulf %268, %267 : vector<2x32xf32>
    %cst_165 = arith.constant 5.000000e-01 : f32
    %270 = vector.broadcast %cst_165 : f32 to vector<2x32xf32>
    %271 = arith.addf %270, %269 : vector<2x32xf32>
    %272 = arith.mulf %261, %238 : vector<2x32xf32>
    %273 = arith.mulf %253, %263 : vector<2x32xf32>
    %274 = arith.addf %272, %273 : vector<2x32xf32>
    %275 = math.tanh %274 : vector<2x32xf32>
    %276 = arith.mulf %271, %275 : vector<2x32xf32>
    %c0_166 = arith.constant 0 : index
    %c0_167 = arith.constant 0 : index
    %277 = vector.load %arg9[%c0_166, %c0_167] : memref<2x32xf32, #tpu.memory_space<vmem>>, vector<2x32xf32>
    tpu.vector_store %arg9[%c0_166, %c0_167], %274 {strides = array<i32>} : memref<2x32xf32, #tpu.memory_space<vmem>>, vector<2x32xf32>,
    %c0_168 = arith.constant 0 : index
    %c0_169 = arith.constant 0 : index
    %278 = vector.load %arg8[%c0_168, %c0_169] : memref<2x32xf32, #tpu.memory_space<vmem>>, vector<2x32xf32>
    tpu.vector_store %arg8[%c0_168, %c0_169], %276 {strides = array<i32>} : memref<2x32xf32, #tpu.memory_space<vmem>>, vector<2x32xf32>,
    %c0_170 = arith.constant 0 : index
    %279 = arith.index_cast %c3_i32_147 : i32 to index
    %c0_171 = arith.constant 0 : index
    %280 = vector.load %arg6[%c0_170, %279, %c0_171] : memref<2x8x32xf32, #tpu.memory_space<vmem>>, vector<2x1x32xf32>
    %281 = vector.shape_cast %280 : vector<2x1x32xf32> to vector<2x32xf32>
    %282 = vector.shape_cast %276 : vector<2x32xf32> to vector<2x1x32xf32>
    tpu.vector_store %arg6[%c0_170, %279, %c0_171], %282 {strides = array<i32>} : memref<2x8x32xf32, #tpu.memory_space<vmem>>, vector<2x1x32xf32>,
    %c4_i32_172 = arith.constant 4 : i32
    %c0_173 = arith.constant 0 : index
    %c0_174 = arith.constant 0 : index
    %283 = vector.load %arg8[%c0_173, %c0_174] : memref<2x32xf32, #tpu.memory_space<vmem>>, vector<2x32xf32>
    %c0_175 = arith.constant 0 : index
    %c0_176 = arith.constant 0 : index
    %284 = vector.load %arg9[%c0_175, %c0_176] : memref<2x32xf32, #tpu.memory_space<vmem>>, vector<2x32xf32>
    %285 = arith.truncf %283 : vector<2x32xf32> to vector<2x32xbf16>
    %c0_177 = arith.constant 0 : index
    %c0_178 = arith.constant 0 : index
    %286 = vector.load %arg4[%c0_177, %c0_178] : memref<32x128xbf16, #tpu.memory_space<vmem>>, vector<32x128xbf16>
    %cst_179 = arith.constant dense<0.000000e+00> : vector<2x128xf32>
    %287 = tpu.matmul %285, %286, %cst_179 {dimension_numbers = #tpu.dot_dimension_numbers<[1], [0], [0], [1], [0, 0, 1, 1], [], []>} : vector<2x32xbf16>, vector<32x128xbf16>, vector<2x128xf32> -> vector<2x128xf32>
    %288 = arith.index_cast %c4_i32_172 : i32 to index
    %c0_180 = arith.constant 0 : index
    %c0_181 = arith.constant 0 : index
    %289 = vector.load %arg7[%288, %c0_180, %c0_181] : memref<8x2x128xf32, #tpu.memory_space<vmem>>, vector<1x2x128xf32>
    %290 = vector.shape_cast %289 : vector<1x2x128xf32> to vector<2x128xf32>
    %291 = arith.addf %290, %287 : vector<2x128xf32>
    %292 = vector.extract_strided_slice %291 {offsets = [0, 0], sizes = [2, 32], strides = [1, 1]} : vector<2x128xf32> to vector<2x32xf32>
    %cst_182 = arith.constant 5.000000e-01 : f32
    %293 = vector.broadcast %cst_182 : f32 to vector<2x32xf32>
    %294 = arith.mulf %293, %292 : vector<2x32xf32>
    %295 = math.tanh %294 : vector<2x32xf32>
    %cst_183 = arith.constant 5.000000e-01 : f32
    %296 = vector.broadcast %cst_183 : f32 to vector<2x32xf32>
    %297 = arith.mulf %296, %295 : vector<2x32xf32>
    %cst_184 = arith.constant 5.000000e-01 : f32
    %298 = vector.broadcast %cst_184 : f32 to vector<2x32xf32>
    %299 = arith.addf %298, %297 : vector<2x32xf32>
    %300 = vector.extract_strided_slice %291 {offsets = [0, 32], sizes = [2, 32], strides = [1, 1]} : vector<2x128xf32> to vector<2x32xf32>
    %cst_185 = arith.constant 5.000000e-01 : f32
    %301 = vector.broadcast %cst_185 : f32 to vector<2x32xf32>
    %302 = arith.mulf %301, %300 : vector<2x32xf32>
    %303 = math.tanh %302 : vector<2x32xf32>
    %cst_186 = arith.constant 5.000000e-01 : f32
    %304 = vector.broadcast %cst_186 : f32 to vector<2x32xf32>
    %305 = arith.mulf %304, %303 : vector<2x32xf32>
    %cst_187 = arith.constant 5.000000e-01 : f32
    %306 = vector.broadcast %cst_187 : f32 to vector<2x32xf32>
    %307 = arith.addf %306, %305 : vector<2x32xf32>
    %308 = vector.extract_strided_slice %291 {offsets = [0, 64], sizes = [2, 32], strides = [1, 1]} : vector<2x128xf32> to vector<2x32xf32>
    %309 = math.tanh %308 : vector<2x32xf32>
    %310 = vector.extract_strided_slice %291 {offsets = [0, 96], sizes = [2, 32], strides = [1, 1]} : vector<2x128xf32> to vector<2x32xf32>
    %cst_188 = arith.constant 5.000000e-01 : f32
    %311 = vector.broadcast %cst_188 : f32 to vector<2x32xf32>
    %312 = arith.mulf %311, %310 : vector<2x32xf32>
    %313 = math.tanh %312 : vector<2x32xf32>
    %cst_189 = arith.constant 5.000000e-01 : f32
    %314 = vector.broadcast %cst_189 : f32 to vector<2x32xf32>
    %315 = arith.mulf %314, %313 : vector<2x32xf32>
    %cst_190 = arith.constant 5.000000e-01 : f32
    %316 = vector.broadcast %cst_190 : f32 to vector<2x32xf32>
    %317 = arith.addf %316, %315 : vector<2x32xf32>
    %318 = arith.mulf %307, %284 : vector<2x32xf32>
    %319 = arith.mulf %299, %309 : vector<2x32xf32>
    %320 = arith.addf %318, %319 : vector<2x32xf32>
    %321 = math.tanh %320 : vector<2x32xf32>
    %322 = arith.mulf %317, %321 : vector<2x32xf32>
    %c0_191 = arith.constant 0 : index
    %c0_192 = arith.constant 0 : index
    %323 = vector.load %arg9[%c0_191, %c0_192] : memref<2x32xf32, #tpu.memory_space<vmem>>, vector<2x32xf32>
    tpu.vector_store %arg9[%c0_191, %c0_192], %320 {strides = array<i32>} : memref<2x32xf32, #tpu.memory_space<vmem>>, vector<2x32xf32>,
    %c0_193 = arith.constant 0 : index
    %c0_194 = arith.constant 0 : index
    %324 = vector.load %arg8[%c0_193, %c0_194] : memref<2x32xf32, #tpu.memory_space<vmem>>, vector<2x32xf32>
    tpu.vector_store %arg8[%c0_193, %c0_194], %322 {strides = array<i32>} : memref<2x32xf32, #tpu.memory_space<vmem>>, vector<2x32xf32>,
    %c0_195 = arith.constant 0 : index
    %325 = arith.index_cast %c4_i32_172 : i32 to index
    %c0_196 = arith.constant 0 : index
    %326 = vector.load %arg6[%c0_195, %325, %c0_196] : memref<2x8x32xf32, #tpu.memory_space<vmem>>, vector<2x1x32xf32>
    %327 = vector.shape_cast %326 : vector<2x1x32xf32> to vector<2x32xf32>
    %328 = vector.shape_cast %322 : vector<2x32xf32> to vector<2x1x32xf32>
    tpu.vector_store %arg6[%c0_195, %325, %c0_196], %328 {strides = array<i32>} : memref<2x8x32xf32, #tpu.memory_space<vmem>>, vector<2x1x32xf32>,
    %c5_i32_197 = arith.constant 5 : i32
    %c0_198 = arith.constant 0 : index
    %c0_199 = arith.constant 0 : index
    %329 = vector.load %arg8[%c0_198, %c0_199] : memref<2x32xf32, #tpu.memory_space<vmem>>, vector<2x32xf32>
    %c0_200 = arith.constant 0 : index
    %c0_201 = arith.constant 0 : index
    %330 = vector.load %arg9[%c0_200, %c0_201] : memref<2x32xf32, #tpu.memory_space<vmem>>, vector<2x32xf32>
    %331 = arith.truncf %329 : vector<2x32xf32> to vector<2x32xbf16>
    %c0_202 = arith.constant 0 : index
    %c0_203 = arith.constant 0 : index
    %332 = vector.load %arg4[%c0_202, %c0_203] : memref<32x128xbf16, #tpu.memory_space<vmem>>, vector<32x128xbf16>
    %cst_204 = arith.constant dense<0.000000e+00> : vector<2x128xf32>
    %333 = tpu.matmul %331, %332, %cst_204 {dimension_numbers = #tpu.dot_dimension_numbers<[1], [0], [0], [1], [0, 0, 1, 1], [], []>} : vector<2x32xbf16>, vector<32x128xbf16>, vector<2x128xf32> -> vector<2x128xf32>
    %334 = arith.index_cast %c5_i32_197 : i32 to index
    %c0_205 = arith.constant 0 : index
    %c0_206 = arith.constant 0 : index
    %335 = vector.load %arg7[%334, %c0_205, %c0_206] : memref<8x2x128xf32, #tpu.memory_space<vmem>>, vector<1x2x128xf32>
    %336 = vector.shape_cast %335 : vector<1x2x128xf32> to vector<2x128xf32>
    %337 = arith.addf %336, %333 : vector<2x128xf32>
    %338 = vector.extract_strided_slice %337 {offsets = [0, 0], sizes = [2, 32], strides = [1, 1]} : vector<2x128xf32> to vector<2x32xf32>
    %cst_207 = arith.constant 5.000000e-01 : f32
    %339 = vector.broadcast %cst_207 : f32 to vector<2x32xf32>
    %340 = arith.mulf %339, %338 : vector<2x32xf32>
    %341 = math.tanh %340 : vector<2x32xf32>
    %cst_208 = arith.constant 5.000000e-01 : f32
    %342 = vector.broadcast %cst_208 : f32 to vector<2x32xf32>
    %343 = arith.mulf %342, %341 : vector<2x32xf32>
    %cst_209 = arith.constant 5.000000e-01 : f32
    %344 = vector.broadcast %cst_209 : f32 to vector<2x32xf32>
    %345 = arith.addf %344, %343 : vector<2x32xf32>
    %346 = vector.extract_strided_slice %337 {offsets = [0, 32], sizes = [2, 32], strides = [1, 1]} : vector<2x128xf32> to vector<2x32xf32>
    %cst_210 = arith.constant 5.000000e-01 : f32
    %347 = vector.broadcast %cst_210 : f32 to vector<2x32xf32>
    %348 = arith.mulf %347, %346 : vector<2x32xf32>
    %349 = math.tanh %348 : vector<2x32xf32>
    %cst_211 = arith.constant 5.000000e-01 : f32
    %350 = vector.broadcast %cst_211 : f32 to vector<2x32xf32>
    %351 = arith.mulf %350, %349 : vector<2x32xf32>
    %cst_212 = arith.constant 5.000000e-01 : f32
    %352 = vector.broadcast %cst_212 : f32 to vector<2x32xf32>
    %353 = arith.addf %352, %351 : vector<2x32xf32>
    %354 = vector.extract_strided_slice %337 {offsets = [0, 64], sizes = [2, 32], strides = [1, 1]} : vector<2x128xf32> to vector<2x32xf32>
    %355 = math.tanh %354 : vector<2x32xf32>
    %356 = vector.extract_strided_slice %337 {offsets = [0, 96], sizes = [2, 32], strides = [1, 1]} : vector<2x128xf32> to vector<2x32xf32>
    %cst_213 = arith.constant 5.000000e-01 : f32
    %357 = vector.broadcast %cst_213 : f32 to vector<2x32xf32>
    %358 = arith.mulf %357, %356 : vector<2x32xf32>
    %359 = math.tanh %358 : vector<2x32xf32>
    %cst_214 = arith.constant 5.000000e-01 : f32
    %360 = vector.broadcast %cst_214 : f32 to vector<2x32xf32>
    %361 = arith.mulf %360, %359 : vector<2x32xf32>
    %cst_215 = arith.constant 5.000000e-01 : f32
    %362 = vector.broadcast %cst_215 : f32 to vector<2x32xf32>
    %363 = arith.addf %362, %361 : vector<2x32xf32>
    %364 = arith.mulf %353, %330 : vector<2x32xf32>
    %365 = arith.mulf %345, %355 : vector<2x32xf32>
    %366 = arith.addf %364, %365 : vector<2x32xf32>
    %367 = math.tanh %366 : vector<2x32xf32>
    %368 = arith.mulf %363, %367 : vector<2x32xf32>
    %c0_216 = arith.constant 0 : index
    %c0_217 = arith.constant 0 : index
    %369 = vector.load %arg9[%c0_216, %c0_217] : memref<2x32xf32, #tpu.memory_space<vmem>>, vector<2x32xf32>
    tpu.vector_store %arg9[%c0_216, %c0_217], %366 {strides = array<i32>} : memref<2x32xf32, #tpu.memory_space<vmem>>, vector<2x32xf32>,
    %c0_218 = arith.constant 0 : index
    %c0_219 = arith.constant 0 : index
    %370 = vector.load %arg8[%c0_218, %c0_219] : memref<2x32xf32, #tpu.memory_space<vmem>>, vector<2x32xf32>
    tpu.vector_store %arg8[%c0_218, %c0_219], %368 {strides = array<i32>} : memref<2x32xf32, #tpu.memory_space<vmem>>, vector<2x32xf32>,
    %c0_220 = arith.constant 0 : index
    %371 = arith.index_cast %c5_i32_197 : i32 to index
    %c0_221 = arith.constant 0 : index
    %372 = vector.load %arg6[%c0_220, %371, %c0_221] : memref<2x8x32xf32, #tpu.memory_space<vmem>>, vector<2x1x32xf32>
    %373 = vector.shape_cast %372 : vector<2x1x32xf32> to vector<2x32xf32>
    %374 = vector.shape_cast %368 : vector<2x32xf32> to vector<2x1x32xf32>
    tpu.vector_store %arg6[%c0_220, %371, %c0_221], %374 {strides = array<i32>} : memref<2x8x32xf32, #tpu.memory_space<vmem>>, vector<2x1x32xf32>,
    %c6_i32_222 = arith.constant 6 : i32
    %c0_223 = arith.constant 0 : index
    %c0_224 = arith.constant 0 : index
    %375 = vector.load %arg8[%c0_223, %c0_224] : memref<2x32xf32, #tpu.memory_space<vmem>>, vector<2x32xf32>
    %c0_225 = arith.constant 0 : index
    %c0_226 = arith.constant 0 : index
    %376 = vector.load %arg9[%c0_225, %c0_226] : memref<2x32xf32, #tpu.memory_space<vmem>>, vector<2x32xf32>
    %377 = arith.truncf %375 : vector<2x32xf32> to vector<2x32xbf16>
    %c0_227 = arith.constant 0 : index
    %c0_228 = arith.constant 0 : index
    %378 = vector.load %arg4[%c0_227, %c0_228] : memref<32x128xbf16, #tpu.memory_space<vmem>>, vector<32x128xbf16>
    %cst_229 = arith.constant dense<0.000000e+00> : vector<2x128xf32>
    %379 = tpu.matmul %377, %378, %cst_229 {dimension_numbers = #tpu.dot_dimension_numbers<[1], [0], [0], [1], [0, 0, 1, 1], [], []>} : vector<2x32xbf16>, vector<32x128xbf16>, vector<2x128xf32> -> vector<2x128xf32>
    %380 = arith.index_cast %c6_i32_222 : i32 to index
    %c0_230 = arith.constant 0 : index
    %c0_231 = arith.constant 0 : index
    %381 = vector.load %arg7[%380, %c0_230, %c0_231] : memref<8x2x128xf32, #tpu.memory_space<vmem>>, vector<1x2x128xf32>
    %382 = vector.shape_cast %381 : vector<1x2x128xf32> to vector<2x128xf32>
    %383 = arith.addf %382, %379 : vector<2x128xf32>
    %384 = vector.extract_strided_slice %383 {offsets = [0, 0], sizes = [2, 32], strides = [1, 1]} : vector<2x128xf32> to vector<2x32xf32>
    %cst_232 = arith.constant 5.000000e-01 : f32
    %385 = vector.broadcast %cst_232 : f32 to vector<2x32xf32>
    %386 = arith.mulf %385, %384 : vector<2x32xf32>
    %387 = math.tanh %386 : vector<2x32xf32>
    %cst_233 = arith.constant 5.000000e-01 : f32
    %388 = vector.broadcast %cst_233 : f32 to vector<2x32xf32>
    %389 = arith.mulf %388, %387 : vector<2x32xf32>
    %cst_234 = arith.constant 5.000000e-01 : f32
    %390 = vector.broadcast %cst_234 : f32 to vector<2x32xf32>
    %391 = arith.addf %390, %389 : vector<2x32xf32>
    %392 = vector.extract_strided_slice %383 {offsets = [0, 32], sizes = [2, 32], strides = [1, 1]} : vector<2x128xf32> to vector<2x32xf32>
    %cst_235 = arith.constant 5.000000e-01 : f32
    %393 = vector.broadcast %cst_235 : f32 to vector<2x32xf32>
    %394 = arith.mulf %393, %392 : vector<2x32xf32>
    %395 = math.tanh %394 : vector<2x32xf32>
    %cst_236 = arith.constant 5.000000e-01 : f32
    %396 = vector.broadcast %cst_236 : f32 to vector<2x32xf32>
    %397 = arith.mulf %396, %395 : vector<2x32xf32>
    %cst_237 = arith.constant 5.000000e-01 : f32
    %398 = vector.broadcast %cst_237 : f32 to vector<2x32xf32>
    %399 = arith.addf %398, %397 : vector<2x32xf32>
    %400 = vector.extract_strided_slice %383 {offsets = [0, 64], sizes = [2, 32], strides = [1, 1]} : vector<2x128xf32> to vector<2x32xf32>
    %401 = math.tanh %400 : vector<2x32xf32>
    %402 = vector.extract_strided_slice %383 {offsets = [0, 96], sizes = [2, 32], strides = [1, 1]} : vector<2x128xf32> to vector<2x32xf32>
    %cst_238 = arith.constant 5.000000e-01 : f32
    %403 = vector.broadcast %cst_238 : f32 to vector<2x32xf32>
    %404 = arith.mulf %403, %402 : vector<2x32xf32>
    %405 = math.tanh %404 : vector<2x32xf32>
    %cst_239 = arith.constant 5.000000e-01 : f32
    %406 = vector.broadcast %cst_239 : f32 to vector<2x32xf32>
    %407 = arith.mulf %406, %405 : vector<2x32xf32>
    %cst_240 = arith.constant 5.000000e-01 : f32
    %408 = vector.broadcast %cst_240 : f32 to vector<2x32xf32>
    %409 = arith.addf %408, %407 : vector<2x32xf32>
    %410 = arith.mulf %399, %376 : vector<2x32xf32>
    %411 = arith.mulf %391, %401 : vector<2x32xf32>
    %412 = arith.addf %410, %411 : vector<2x32xf32>
    %413 = math.tanh %412 : vector<2x32xf32>
    %414 = arith.mulf %409, %413 : vector<2x32xf32>
    %c0_241 = arith.constant 0 : index
    %c0_242 = arith.constant 0 : index
    %415 = vector.load %arg9[%c0_241, %c0_242] : memref<2x32xf32, #tpu.memory_space<vmem>>, vector<2x32xf32>
    tpu.vector_store %arg9[%c0_241, %c0_242], %412 {strides = array<i32>} : memref<2x32xf32, #tpu.memory_space<vmem>>, vector<2x32xf32>,
    %c0_243 = arith.constant 0 : index
    %c0_244 = arith.constant 0 : index
    %416 = vector.load %arg8[%c0_243, %c0_244] : memref<2x32xf32, #tpu.memory_space<vmem>>, vector<2x32xf32>
    tpu.vector_store %arg8[%c0_243, %c0_244], %414 {strides = array<i32>} : memref<2x32xf32, #tpu.memory_space<vmem>>, vector<2x32xf32>,
    %c0_245 = arith.constant 0 : index
    %417 = arith.index_cast %c6_i32_222 : i32 to index
    %c0_246 = arith.constant 0 : index
    %418 = vector.load %arg6[%c0_245, %417, %c0_246] : memref<2x8x32xf32, #tpu.memory_space<vmem>>, vector<2x1x32xf32>
    %419 = vector.shape_cast %418 : vector<2x1x32xf32> to vector<2x32xf32>
    %420 = vector.shape_cast %414 : vector<2x32xf32> to vector<2x1x32xf32>
    tpu.vector_store %arg6[%c0_245, %417, %c0_246], %420 {strides = array<i32>} : memref<2x8x32xf32, #tpu.memory_space<vmem>>, vector<2x1x32xf32>,
    %c7_i32_247 = arith.constant 7 : i32
    %c0_248 = arith.constant 0 : index
    %c0_249 = arith.constant 0 : index
    %421 = vector.load %arg8[%c0_248, %c0_249] : memref<2x32xf32, #tpu.memory_space<vmem>>, vector<2x32xf32>
    %c0_250 = arith.constant 0 : index
    %c0_251 = arith.constant 0 : index
    %422 = vector.load %arg9[%c0_250, %c0_251] : memref<2x32xf32, #tpu.memory_space<vmem>>, vector<2x32xf32>
    %423 = arith.truncf %421 : vector<2x32xf32> to vector<2x32xbf16>
    %c0_252 = arith.constant 0 : index
    %c0_253 = arith.constant 0 : index
    %424 = vector.load %arg4[%c0_252, %c0_253] : memref<32x128xbf16, #tpu.memory_space<vmem>>, vector<32x128xbf16>
    %cst_254 = arith.constant dense<0.000000e+00> : vector<2x128xf32>
    %425 = tpu.matmul %423, %424, %cst_254 {dimension_numbers = #tpu.dot_dimension_numbers<[1], [0], [0], [1], [0, 0, 1, 1], [], []>} : vector<2x32xbf16>, vector<32x128xbf16>, vector<2x128xf32> -> vector<2x128xf32>
    %426 = arith.index_cast %c7_i32_247 : i32 to index
    %c0_255 = arith.constant 0 : index
    %c0_256 = arith.constant 0 : index
    %427 = vector.load %arg7[%426, %c0_255, %c0_256] : memref<8x2x128xf32, #tpu.memory_space<vmem>>, vector<1x2x128xf32>
    %428 = vector.shape_cast %427 : vector<1x2x128xf32> to vector<2x128xf32>
    %429 = arith.addf %428, %425 : vector<2x128xf32>
    %430 = vector.extract_strided_slice %429 {offsets = [0, 0], sizes = [2, 32], strides = [1, 1]} : vector<2x128xf32> to vector<2x32xf32>
    %cst_257 = arith.constant 5.000000e-01 : f32
    %431 = vector.broadcast %cst_257 : f32 to vector<2x32xf32>
    %432 = arith.mulf %431, %430 : vector<2x32xf32>
    %433 = math.tanh %432 : vector<2x32xf32>
    %cst_258 = arith.constant 5.000000e-01 : f32
    %434 = vector.broadcast %cst_258 : f32 to vector<2x32xf32>
    %435 = arith.mulf %434, %433 : vector<2x32xf32>
    %cst_259 = arith.constant 5.000000e-01 : f32
    %436 = vector.broadcast %cst_259 : f32 to vector<2x32xf32>
    %437 = arith.addf %436, %435 : vector<2x32xf32>
    %438 = vector.extract_strided_slice %429 {offsets = [0, 32], sizes = [2, 32], strides = [1, 1]} : vector<2x128xf32> to vector<2x32xf32>
    %cst_260 = arith.constant 5.000000e-01 : f32
    %439 = vector.broadcast %cst_260 : f32 to vector<2x32xf32>
    %440 = arith.mulf %439, %438 : vector<2x32xf32>
    %441 = math.tanh %440 : vector<2x32xf32>
    %cst_261 = arith.constant 5.000000e-01 : f32
    %442 = vector.broadcast %cst_261 : f32 to vector<2x32xf32>
    %443 = arith.mulf %442, %441 : vector<2x32xf32>
    %cst_262 = arith.constant 5.000000e-01 : f32
    %444 = vector.broadcast %cst_262 : f32 to vector<2x32xf32>
    %445 = arith.addf %444, %443 : vector<2x32xf32>
    %446 = vector.extract_strided_slice %429 {offsets = [0, 64], sizes = [2, 32], strides = [1, 1]} : vector<2x128xf32> to vector<2x32xf32>
    %447 = math.tanh %446 : vector<2x32xf32>
    %448 = vector.extract_strided_slice %429 {offsets = [0, 96], sizes = [2, 32], strides = [1, 1]} : vector<2x128xf32> to vector<2x32xf32>
    %cst_263 = arith.constant 5.000000e-01 : f32
    %449 = vector.broadcast %cst_263 : f32 to vector<2x32xf32>
    %450 = arith.mulf %449, %448 : vector<2x32xf32>
    %451 = math.tanh %450 : vector<2x32xf32>
    %cst_264 = arith.constant 5.000000e-01 : f32
    %452 = vector.broadcast %cst_264 : f32 to vector<2x32xf32>
    %453 = arith.mulf %452, %451 : vector<2x32xf32>
    %cst_265 = arith.constant 5.000000e-01 : f32
    %454 = vector.broadcast %cst_265 : f32 to vector<2x32xf32>
    %455 = arith.addf %454, %453 : vector<2x32xf32>
    %456 = arith.mulf %445, %422 : vector<2x32xf32>
    %457 = arith.mulf %437, %447 : vector<2x32xf32>
    %458 = arith.addf %456, %457 : vector<2x32xf32>
    %459 = math.tanh %458 : vector<2x32xf32>
    %460 = arith.mulf %455, %459 : vector<2x32xf32>
    %c0_266 = arith.constant 0 : index
    %c0_267 = arith.constant 0 : index
    %461 = vector.load %arg9[%c0_266, %c0_267] : memref<2x32xf32, #tpu.memory_space<vmem>>, vector<2x32xf32>
    tpu.vector_store %arg9[%c0_266, %c0_267], %458 {strides = array<i32>} : memref<2x32xf32, #tpu.memory_space<vmem>>, vector<2x32xf32>,
    %c0_268 = arith.constant 0 : index
    %c0_269 = arith.constant 0 : index
    %462 = vector.load %arg8[%c0_268, %c0_269] : memref<2x32xf32, #tpu.memory_space<vmem>>, vector<2x32xf32>
    tpu.vector_store %arg8[%c0_268, %c0_269], %460 {strides = array<i32>} : memref<2x32xf32, #tpu.memory_space<vmem>>, vector<2x32xf32>,
    %c0_270 = arith.constant 0 : index
    %463 = arith.index_cast %c7_i32_247 : i32 to index
    %c0_271 = arith.constant 0 : index
    %464 = vector.load %arg6[%c0_270, %463, %c0_271] : memref<2x8x32xf32, #tpu.memory_space<vmem>>, vector<2x1x32xf32>
    %465 = vector.shape_cast %464 : vector<2x1x32xf32> to vector<2x32xf32>
    %466 = vector.shape_cast %460 : vector<2x32xf32> to vector<2x1x32xf32>
    tpu.vector_store %arg6[%c0_270, %463, %c0_271], %466 {strides = array<i32>} : memref<2x8x32xf32, #tpu.memory_space<vmem>>, vector<2x1x32xf32>,
    %c8_i32_272 = arith.constant 8 : i32
    return
  }
  func.func @transform_0(%arg0: i32, %arg1: i32) -> (i32, i32, i32) {
    %c0_i32 = arith.constant 0 : i32
    %c0_i32_0 = arith.constant 0 : i32
    return %arg1, %arg0, %c0_i32 : i32, i32, i32
  }
  func.func @transform_1(%arg0: i32, %arg1: i32) -> (i32, i32) {
    %c0_i32 = arith.constant 0 : i32
    %c0_i32_0 = arith.constant 0 : i32
    %c0_i32_1 = arith.constant 0 : i32
    return %c0_i32, %c0_i32_0 : i32, i32
  }
  func.func @transform_2(%arg0: i32, %arg1: i32) -> (i32, i32) {
    %c0_i32 = arith.constant 0 : i32
    %c0_i32_0 = arith.constant 0 : i32
    %c0_i32_1 = arith.constant 0 : i32
    return %c0_i32, %c0_i32_0 : i32, i32
  }
  func.func @transform_3(%arg0: i32, %arg1: i32) -> (i32, i32) {
    %c0_i32 = arith.constant 0 : i32
    %c0_i32_0 = arith.constant 0 : i32
    %c0_i32_1 = arith.constant 0 : i32
    return %c0_i32, %c0_i32_0 : i32, i32
  }
  func.func @transform_4(%arg0: i32, %arg1: i32) -> (i32, i32, i32) {
    %c0_i32 = arith.constant 0 : i32
    %c0_i32_0 = arith.constant 0 : i32
    return %arg0, %arg1, %c0_i32 : i32, i32, i32
  }
}

</mosaic_0001>

<llo_original>
// kernel: tpu_custom_call.1
$region0: #{tpu_custom_call.1}
  #allocation0 [shape = 'u32[]', space=smem, size = 0x4, offset = 0x4, fixed_abs, tag = 'smem constant byte address 0x4 - core index']
  #allocation1 [shape = 'u32[72,128]{1,0:T(1,128)}', space=vmem, size = 0x9000, scoped, tag = 'internal scratch']
  #allocation2 [shape = 'f32[8,2,128]{2,1,0:T(2,128)}', space=vmem, size = 0x2000, scoped, tag = 'scratch operand']
  #allocation3 [shape = 'f32[2,32]{1,0:T(2,128)}', space=vmem, size = 0x400, scoped, tag = 'scratch operand']
  #allocation4 [shape = 'f32[2,32]{1,0:T(2,128)}', space=vmem, size = 0x400, scoped, tag = 'scratch operand']
  %s0 = inlined_call_operand.hbm [shape: bf16[8,2,16], index: 0, kind: input, shape index: {}]
  %s1 = inlined_call_operand.hbm [shape: bf16[16,128], index: 1, kind: input, shape index: {}]
  %s2 = inlined_call_operand.hbm [shape: bf16[32,128], index: 2, kind: input, shape index: {}]
  %s3 = inlined_call_operand.vmem [shape: f32[1,128], index: 3, kind: input, shape index: {}]
  %s4 = inlined_call_operand.hbm [shape: f32[2,8,32], index: 4, kind: output, shape index: {}]
  %s5 = sld [smem:[#allocation0]]
  $region42: #{tpu_custom_call.1} parent=0
    _
  %s7 = ssub.s32 1, %s5
  %s8 = scalar_select 0, %s7, %s5
  $region1: #{tpu_custom_call.1} parent=0
    #allocation5 [shape = 'u8[4096]{0}', space=vmem, size = 0x1000, scoped, tag = 'input window, operand 0, single buffered']
    #allocation6 [shape = 's32[1]{0}', space=sflag, size = 0x4, scoped, tag = 'scoped memory for tpu_custom_call.1']
    #allocation7 [shape = 's32[1]{0}', space=sflag, size = 0x4, scoped, tag = 'scoped memory for tpu_custom_call.1']
    #allocation8 [shape = 'u8[4096]{0}', space=vmem, size = 0x1000, scoped, tag = 'input window, operand 1, single buffered']
    #allocation9 [shape = 's32[1]{0}', space=sflag, size = 0x4, scoped, tag = 'scoped memory for tpu_custom_call.1']
    #allocation10 [shape = 'u8[8192]{0}', space=vmem, size = 0x2000, scoped, tag = 'input window, operand 2, single buffered']
    #allocation11 [shape = 'u8[8192]{0}', space=vmem, size = 0x2000, scoped, tag = 'output window, operand 0, single buffered']
    %9 = vsyncpa [#allocation6], 0
    %10 = vsyncpa [#allocation9], 0
    %11 = vsyncpa [#allocation7], 0
    // Predicated region
    $region2: #{tpu_custom_call.1} parent=1 // pred_check
      _
    $region3: #{tpu_custom_call.1} parent=1 // pred_check_branch
      %13 = sbr.rel (0) target = $region5
    $region4: #{tpu_custom_call.1} parent=1 // pred_region
      %15 = vsyncadd [#allocation6], 0
      %s16 = sshll.u32 %s0, 4
      %s17 = int_to_ptr.hbm [resolvable:$true] %s16
      %s18 = sshll.u32 [#allocation5], 4
      %s19 = int_to_ptr.vmem [resolvable:$true] %s18
      %24 = dma.hbm_to_vmem [thread:$0]  %s17, 128, %s19, [#allocation6], 16, 16, 1
    $region5: #{tpu_custom_call.1} parent=1 // pred_fallthru
      _
    // Predicated region
    $region6: #{tpu_custom_call.1} parent=1 // pred_check
      _
    $region7: #{tpu_custom_call.1} parent=1 // pred_check_branch
      %26 = sbr.rel (0) target = $region9
    $region8: #{tpu_custom_call.1} parent=1 // pred_region
      %28 = vsyncadd [#allocation9], 0
      %s29 = sshll.u32 %s1, 4
      %s30 = int_to_ptr.hbm [resolvable:$true] %s29
      %s31 = sshll.u32 [#allocation8], 4
      %s32 = int_to_ptr.vmem [resolvable:$true] %s31
      %37 = dma.hbm_to_vmem [thread:$0]  %s30, 128, %s32, [#allocation9], 64, 64, 4
    $region9: #{tpu_custom_call.1} parent=1 // pred_fallthru
      _
    // Predicated region
    $region10: #{tpu_custom_call.1} parent=1 // pred_check
      _
    $region11: #{tpu_custom_call.1} parent=1 // pred_check_branch
      %39 = sbr.rel (0) target = $region13
    $region12: #{tpu_custom_call.1} parent=1 // pred_region
      %41 = vsyncadd [#allocation9], 0
      %s42 = sshll.u32 %s2, 4
      %s43 = int_to_ptr.hbm [resolvable:$true] %s42
      %s44 = sshll.u32 [#allocation10], 4
      %s45 = int_to_ptr.vmem [resolvable:$true] %s44
      %50 = dma.hbm_to_vmem [thread:$0]  %s43, 256, %s45, [#allocation9], 64, 64, 4
    $region13: #{tpu_custom_call.1} parent=1 // pred_fallthru
      _
    // Predicated region
    $region14: #{tpu_custom_call.1} parent=1 // pred_check
      _
    $region15: #{tpu_custom_call.1} parent=1 // pred_check_branch
      %52 = sbr.rel (0) target = $region17
    $region16: #{tpu_custom_call.1} parent=1 // pred_region
      _
    $region17: #{tpu_custom_call.1} parent=1 // pred_fallthru
      _
    // Predicated region
    $region18: #{tpu_custom_call.1} parent=1 // pred_check
      _
    $region19: #{tpu_custom_call.1} parent=1 // pred_check_branch
      %54 = sbr.rel (0) target = $region21
    $region20: #{tpu_custom_call.1} parent=1 // pred_region
      %56 = dma.done [#allocation6], 128
    $region21: #{tpu_custom_call.1} parent=1 // pred_fallthru
      _
    // Predicated region
    $region22: #{tpu_custom_call.1} parent=1 // pred_check
      _
    $region23: #{tpu_custom_call.1} parent=1 // pred_check_branch
      %58 = sbr.rel (0) target = $region25
    $region24: #{tpu_custom_call.1} parent=1 // pred_region
      %60 = dma.done [#allocation9], 128
    $region25: #{tpu_custom_call.1} parent=1 // pred_fallthru
      _
    // Predicated region
    $region26: #{tpu_custom_call.1} parent=1 // pred_check
      _
    $region27: #{tpu_custom_call.1} parent=1 // pred_check_branch
      %62 = sbr.rel (0) target = $region29
    $region28: #{tpu_custom_call.1} parent=1 // pred_region
      %64 = dma.done [#allocation9], 256
    $region29: #{tpu_custom_call.1} parent=1 // pred_fallthru
      _
    %p66 = scmp.eq.s32.totalorder 0, 0
    // Predicated region
    $region30: #{tpu_custom_call.1} parent=1 // pred_check
      %p67 = pneg %p66
    $region31: #{tpu_custom_call.1} parent=1 // pred_check_branch
      %69 = sbr.rel (%p67) target = $region33
    $region32: #{tpu_custom_call.1} parent=1 // pred_region
      %vm70 = vcmask 254976
      %71 = vst.msk [vmem:[#allocation3] sm:$0x3] %vm70, 0.0
      %72 = vst.msk [vmem:[#allocation4] sm:$0x3] %vm70, 0.0
    $region33: #{tpu_custom_call.1} parent=1 // pred_fallthru
      _
    %v73 = vld [vmem:[#allocation5] sm:$0x1]
    %v74 = vld [vmem:[#allocation8] sm:$0xf]
    %v75 = vld [vmem:[#allocation8 + $0x4] sm:$0xf]
    %v76 = vld [vmem:[%s3] sm:$0x1]
    %v78 = vperm.slane %v76, 0
    %v82 = vunpack.c.l.b16 %v74
    %v83 = vunpack.c.l.b16 %v75
    %v84 = vpack.c.b16 %v83, %v82
    %vm86 = vcmask 130048
    %v88 = vsel %vm86, %v73, 0
    %90 = vmatpush.bf16.msra.mxu0 0
    %91 = vmatpush.bf16.msra.mxu0 0
    %92 = vmatpush.bf16.msra.mxu0 0
    %93 = vmatpush.bf16.msra.mxu0 0
    %94 = vmatpush.bf16.msra.mxu0 0
    %95 = vmatpush.bf16.msra.mxu0 0
    %96 = vmatpush.bf16.msra.mxu0 0
    %97 = vmatpush.bf16.msra.mxu0 %v84
    %98 = vmatmul.bf16.gmra.mxu0 %v88
    %v99 = vpop.f32.mrf.mxu0
    %v100 = vadd.f32 %v78, %v99
    %v101 = vpop.f32.mrf.mxu0
    %102 = vdwg.mxu0
    %103 = vst [vmem:[#allocation2] sm:$0x3] %v100
    %s104 = scalar_lea.vmem [#allocation5], 1
    %v105 = vld [vmem:[%s104] sm:$0x1]
    %v106 = vld [vmem:[#allocation8] sm:$0xf]
    %v107 = vld [vmem:[#allocation8 + $0x4] sm:$0xf]
    %v108 = vld [vmem:[%s3] sm:$0x1]
    %v110 = vperm.slane %v108, 0
    %v114 = vunpack.c.l.b16 %v106
    %v115 = vunpack.c.l.b16 %v107
    %v116 = vpack.c.b16 %v115, %v114
    %v119 = vsel %vm86, %v105, 0
    %121 = vmatpush.bf16.msra.mxu0 0
    %122 = vmatpush.bf16.msra.mxu0 0
    %123 = vmatpush.bf16.msra.mxu0 0
    %124 = vmatpush.bf16.msra.mxu0 0
    %125 = vmatpush.bf16.msra.mxu0 0
    %126 = vmatpush.bf16.msra.mxu0 0
    %127 = vmatpush.bf16.msra.mxu0 0
    %128 = vmatpush.bf16.msra.mxu0 %v116
    %129 = vmatmul.bf16.gmra.mxu0 %v119
    %v130 = vpop.f32.mrf.mxu0
    %v131 = vadd.f32 %v110, %v130
    %v132 = vpop.f32.mrf.mxu0
    %133 = vdwg.mxu0
    %s134 = scalar_lea.vmem [#allocation2], 2
    %135 = vst [vmem:[%s134] sm:$0x3] %v131
    %s136 = scalar_lea.vmem [#allocation5], 2
    %v137 = vld [vmem:[%s136] sm:$0x1]
    %v138 = vld [vmem:[#allocation8] sm:$0xf]
    %v139 = vld [vmem:[#allocation8 + $0x4] sm:$0xf]
    %v140 = vld [vmem:[%s3] sm:$0x1]
    %v142 = vperm.slane %v140, 0
    %v146 = vunpack.c.l.b16 %v138
    %v147 = vunpack.c.l.b16 %v139
    %v148 = vpack.c.b16 %v147, %v146
    %v151 = vsel %vm86, %v137, 0
    %153 = vmatpush.bf16.msra.mxu0 0
    %154 = vmatpush.bf16.msra.mxu0 0
    %155 = vmatpush.bf16.msra.mxu0 0
    %156 = vmatpush.bf16.msra.mxu0 0
    %157 = vmatpush.bf16.msra.mxu0 0
    %158 = vmatpush.bf16.msra.mxu0 0
    %159 = vmatpush.bf16.msra.mxu0 0
    %160 = vmatpush.bf16.msra.mxu0 %v148
    %161 = vmatmul.bf16.gmra.mxu0 %v151
    %v162 = vpop.f32.mrf.mxu0
    %v163 = vadd.f32 %v142, %v162
    %v164 = vpop.f32.mrf.mxu0
    %165 = vdwg.mxu0
    %s166 = scalar_lea.vmem [#allocation2], 4
    %167 = vst [vmem:[%s166] sm:$0x3] %v163
    %s168 = scalar_lea.vmem [#allocation5], 3
    %v169 = vld [vmem:[%s168] sm:$0x1]
    %v170 = vld [vmem:[#allocation8] sm:$0xf]
    %v171 = vld [vmem:[#allocation8 + $0x4] sm:$0xf]
    %v172 = vld [vmem:[%s3] sm:$0x1]
    %v174 = vperm.slane %v172, 0
    %v178 = vunpack.c.l.b16 %v170
    %v179 = vunpack.c.l.b16 %v171
    %v180 = vpack.c.b16 %v179, %v178
    %v183 = vsel %vm86, %v169, 0
    %185 = vmatpush.bf16.msra.mxu0 0
    %186 = vmatpush.bf16.msra.mxu0 0
    %187 = vmatpush.bf16.msra.mxu0 0
    %188 = vmatpush.bf16.msra.mxu0 0
    %189 = vmatpush.bf16.msra.mxu0 0
    %190 = vmatpush.bf16.msra.mxu0 0
    %191 = vmatpush.bf16.msra.mxu0 0
    %192 = vmatpush.bf16.msra.mxu0 %v180
    %193 = vmatmul.bf16.gmra.mxu0 %v183
    %v194 = vpop.f32.mrf.mxu0
    %v195 = vadd.f32 %v174, %v194
    %v196 = vpop.f32.mrf.mxu0
    %197 = vdwg.mxu0
    %s198 = scalar_lea.vmem [#allocation2], 6
    %199 = vst [vmem:[%s198] sm:$0x3] %v195
    %s200 = scalar_lea.vmem [#allocation5], 4
    %v201 = vld [vmem:[%s200] sm:$0x1]
    %v202 = vld [vmem:[#allocation8] sm:$0xf]
    %v203 = vld [vmem:[#allocation8 + $0x4] sm:$0xf]
    %v204 = vld [vmem:[%s3] sm:$0x1]
    %v206 = vperm.slane %v204, 0
    %v210 = vunpack.c.l.b16 %v202
    %v211 = vunpack.c.l.b16 %v203
    %v212 = vpack.c.b16 %v211, %v210
    %v215 = vsel %vm86, %v201, 0
    %217 = vmatpush.bf16.msra.mxu0 0
    %218 = vmatpush.bf16.msra.mxu0 0
    %219 = vmatpush.bf16.msra.mxu0 0
    %220 = vmatpush.bf16.msra.mxu0 0
    %221 = vmatpush.bf16.msra.mxu0 0
    %222 = vmatpush.bf16.msra.mxu0 0
    %223 = vmatpush.bf16.msra.mxu0 0
    %224 = vmatpush.bf16.msra.mxu0 %v212
    %225 = vmatmul.bf16.gmra.mxu0 %v215
    %v226 = vpop.f32.mrf.mxu0
    %v227 = vadd.f32 %v206, %v226
    %v228 = vpop.f32.mrf.mxu0
    %229 = vdwg.mxu0
    %s230 = scalar_lea.vmem [#allocation2], 8
    %231 = vst [vmem:[%s230] sm:$0x3] %v227
    %s232 = scalar_lea.vmem [#allocation5], 5
    %v233 = vld [vmem:[%s232] sm:$0x1]
    %v234 = vld [vmem:[#allocation8] sm:$0xf]
    %v235 = vld [vmem:[#allocation8 + $0x4] sm:$0xf]
    %v236 = vld [vmem:[%s3] sm:$0x1]
    %v238 = vperm.slane %v236, 0
    %v242 = vunpack.c.l.b16 %v234
    %v243 = vunpack.c.l.b16 %v235
    %v244 = vpack.c.b16 %v243, %v242
    %v247 = vsel %vm86, %v233, 0
    %249 = vmatpush.bf16.msra.mxu0 0
    %250 = vmatpush.bf16.msra.mxu0 0
    %251 = vmatpush.bf16.msra.mxu0 0
    %252 = vmatpush.bf16.msra.mxu0 0
    %253 = vmatpush.bf16.msra.mxu0 0
    %254 = vmatpush.bf16.msra.mxu0 0
    %255 = vmatpush.bf16.msra.mxu0 0
    %256 = vmatpush.bf16.msra.mxu0 %v244
    %257 = vmatmul.bf16.gmra.mxu0 %v247
    %v258 = vpop.f32.mrf.mxu0
    %v259 = vadd.f32 %v238, %v258
    %v260 = vpop.f32.mrf.mxu0
    %261 = vdwg.mxu0
    %s262 = scalar_lea.vmem [#allocation2], 10
    %263 = vst [vmem:[%s262] sm:$0x3] %v259
    %s264 = scalar_lea.vmem [#allocation5], 6
    %v265 = vld [vmem:[%s264] sm:$0x1]
    %v266 = vld [vmem:[#allocation8] sm:$0xf]
    %v267 = vld [vmem:[#allocation8 + $0x4] sm:$0xf]
    %v268 = vld [vmem:[%s3] sm:$0x1]
    %v270 = vperm.slane %v268, 0
    %v274 = vunpack.c.l.b16 %v266
    %v275 = vunpack.c.l.b16 %v267
    %v276 = vpack.c.b16 %v275, %v274
    %v279 = vsel %vm86, %v265, 0
    %281 = vmatpush.bf16.msra.mxu0 0
    %282 = vmatpush.bf16.msra.mxu0 0
    %283 = vmatpush.bf16.msra.mxu0 0
    %284 = vmatpush.bf16.msra.mxu0 0
    %285 = vmatpush.bf16.msra.mxu0 0
    %286 = vmatpush.bf16.msra.mxu0 0
    %287 = vmatpush.bf16.msra.mxu0 0
    %288 = vmatpush.bf16.msra.mxu0 %v276
    %289 = vmatmul.bf16.gmra.mxu0 %v279
    %v290 = vpop.f32.mrf.mxu0
    %v291 = vadd.f32 %v270, %v290
    %v292 = vpop.f32.mrf.mxu0
    %293 = vdwg.mxu0
    %s294 = scalar_lea.vmem [#allocation2], 12
    %295 = vst [vmem:[%s294] sm:$0x3] %v291
    %s296 = scalar_lea.vmem [#allocation5], 7
    %v297 = vld [vmem:[%s296] sm:$0x1]
    %v298 = vld [vmem:[#allocation8] sm:$0xf]
    %v299 = vld [vmem:[#allocation8 + $0x4] sm:$0xf]
    %v300 = vld [vmem:[%s3] sm:$0x1]
    %v302 = vperm.slane %v300, 0
    %v306 = vunpack.c.l.b16 %v298
    %v307 = vunpack.c.l.b16 %v299
    %v308 = vpack.c.b16 %v307, %v306
    %v311 = vsel %vm86, %v297, 0
    %313 = vmatpush.bf16.msra.mxu0 0
    %314 = vmatpush.bf16.msra.mxu0 0
    %315 = vmatpush.bf16.msra.mxu0 0
    %316 = vmatpush.bf16.msra.mxu0 0
    %317 = vmatpush.bf16.msra.mxu0 0
    %318 = vmatpush.bf16.msra.mxu0 0
    %319 = vmatpush.bf16.msra.mxu0 0
    %320 = vmatpush.bf16.msra.mxu0 %v308
    %321 = vmatmul.bf16.gmra.mxu0 %v311
    %v322 = vpop.f32.mrf.mxu0
    %v323 = vadd.f32 %v302, %v322
    %v324 = vpop.f32.mrf.mxu0
    %325 = vdwg.mxu0
    %s326 = scalar_lea.vmem [#allocation2], 14
    %327 = vst [vmem:[%s326] sm:$0x3] %v323
    %v328 = vld [vmem:[#allocation3] sm:$0x3]
    %v329 = vld [vmem:[#allocation4] sm:$0x3]
    %v330 = vpack.c.bf16 %v328, %v328
    %v331 = vld [vmem:[#allocation10] sm:$0xf]
    %v332 = vld [vmem:[#allocation10 + $0x4] sm:$0xf]
    %v333 = vld [vmem:[#allocation10 + $0x8] sm:$0xf]
    %v334 = vld [vmem:[#allocation10 + $0xc] sm:$0xf]
    %v339 = vunpack.c.l.b16 %v331
    %v340 = vunpack.c.l.b16 %v332
    %v341 = vunpack.c.l.b16 %v333
    %v342 = vunpack.c.l.b16 %v334
    %v343 = vpack.c.b16 %v340, %v339
    %v344 = vpack.c.b16 %v342, %v341
    %vm347 = vcmask 261120
    %v349 = vsel %vm347, %v330, 0
    %351 = vmatpush.bf16.msra.mxu0 0
    %352 = vmatpush.bf16.msra.mxu0 0
    %353 = vmatpush.bf16.msra.mxu0 0
    %354 = vmatpush.bf16.msra.mxu0 0
    %355 = vmatpush.bf16.msra.mxu0 0
    %356 = vmatpush.bf16.msra.mxu0 0
    %357 = vmatpush.bf16.msra.mxu0 %v344
    %358 = vmatpush.bf16.msra.mxu0 %v343
    %359 = vmatmul.bf16.gmra.mxu0 %v349
    %v360 = vpop.f32.mrf.mxu0
    %v361 = vadd.f32 0.0, %v360
    %v362 = vpop.f32.mrf.mxu0
    %363 = vdwg.mxu0
    %v364 = vld [vmem:[#allocation2] sm:$0x3]
    %v365 = vadd.f32 %v364, %v361
    %v366 = vmul.f32 %v365, 0.5
    %v367 = vtanh.pop %v366
    %v368 = vmul.f32 %v367, 0.5
    %v369 = vadd.f32 %v368, 0.5
    %v370 = vtanh.pop %v365
    %372 = vrot.lane.b32.xlu0 %v329, 32
    %v373 = vpop.permute.xlu0 %372
    %v375 = vmul.f32 %v369, %v373
    %377 = vrot.lane.b32.xlu0 %v370, 64
    %v378 = vpop.permute.xlu0 %377
    %v380 = vmul.f32 %v369, %v378
    %382 = vrot.lane.b32.xlu0 %v380, 32
    %v383 = vpop.permute.xlu0 %382
    %v385 = vadd.f32 %v375, %v383
    %v386 = vtanh.pop %v385
    %388 = vrot.lane.b32.xlu0 %v386, 64
    %v389 = vpop.permute.xlu0 %388
    %v391 = vmul.f32 %v369, %v389
    %393 = vrot.lane.b32.xlu0 %v385, 96
    %v394 = vpop.permute.xlu0 %393
    %vm396 = vcmask 254976
    %397 = vst.msk [vmem:[#allocation4] sm:$0x3] %vm396, %v394
    %399 = vrot.lane.b32.xlu0 %v391, 32
    %v400 = vpop.permute.xlu0 %399
    %402 = vst.msk [vmem:[#allocation3] sm:$0x3] %vm396, %v400
    %v403 = vrot.slane %v391, 1
    %v404 = vperm.slane %v391, 0
    %v405 = vperm.slane %v403, 0
    %406 = vrot.lane.b32.xlu0 %v404, 32
    %v407 = vpop.permute.xlu0 %406
    %408 = vrot.lane.b32.xlu0 %v405, 32
    %v409 = vpop.permute.xlu0 %408
    %vm412 = vcmask 253952
    %413 = vst.msk [vmem:[#allocation11] sm:$0x1] %vm412, %v407
    %414 = vst.msk [vmem:[#allocation11 + $0x8] sm:$0x1] %vm412, %v409
    %v415 = vld [vmem:[#allocation3] sm:$0x3]
    %v416 = vld [vmem:[#allocation4] sm:$0x3]
    %v417 = vpack.c.bf16 %v415, %v415
    %v418 = vld [vmem:[#allocation10] sm:$0xf]
    %v419 = vld [vmem:[#allocation10 + $0x4] sm:$0xf]
    %v420 = vld [vmem:[#allocation10 + $0x8] sm:$0xf]
    %v421 = vld [vmem:[#allocation10 + $0xc] sm:$0xf]
    %v426 = vunpack.c.l.b16 %v418
    %v427 = vunpack.c.l.b16 %v419
    %v428 = vunpack.c.l.b16 %v420
    %v429 = vunpack.c.l.b16 %v421
    %v430 = vpack.c.b16 %v427, %v426
    %v431 = vpack.c.b16 %v429, %v428
    %v435 = vsel %vm347, %v417, 0
    %437 = vmatpush.bf16.msra.mxu0 0
    %438 = vmatpush.bf16.msra.mxu0 0
    %439 = vmatpush.bf16.msra.mxu0 0
    %440 = vmatpush.bf16.msra.mxu0 0
    %441 = vmatpush.bf16.msra.mxu0 0
    %442 = vmatpush.bf16.msra.mxu0 0
    %443 = vmatpush.bf16.msra.mxu0 %v431
    %444 = vmatpush.bf16.msra.mxu0 %v430
    %445 = vmatmul.bf16.gmra.mxu0 %v435
    %v446 = vpop.f32.mrf.mxu0
    %v447 = vadd.f32 0.0, %v446
    %v448 = vpop.f32.mrf.mxu0
    %449 = vdwg.mxu0
    %v450 = vld [vmem:[%s134] sm:$0x3]
    %v451 = vadd.f32 %v450, %v447
    %v452 = vmul.f32 %v451, 0.5
    %v453 = vtanh.pop %v452
    %v454 = vmul.f32 %v453, 0.5
    %v455 = vadd.f32 %v454, 0.5
    %v456 = vtanh.pop %v451
    %458 = vrot.lane.b32.xlu0 %v416, 32
    %v459 = vpop.permute.xlu0 %458
    %v461 = vmul.f32 %v455, %v459
    %463 = vrot.lane.b32.xlu0 %v456, 64
    %v464 = vpop.permute.xlu0 %463
    %v466 = vmul.f32 %v455, %v464
    %468 = vrot.lane.b32.xlu0 %v466, 32
    %v469 = vpop.permute.xlu0 %468
    %v471 = vadd.f32 %v461, %v469
    %v472 = vtanh.pop %v471
    %474 = vrot.lane.b32.xlu0 %v472, 64
    %v475 = vpop.permute.xlu0 %474
    %v477 = vmul.f32 %v455, %v475
    %479 = vrot.lane.b32.xlu0 %v471, 96
    %v480 = vpop.permute.xlu0 %479
    %482 = vst.msk [vmem:[#allocation4] sm:$0x3] %vm396, %v480
    %484 = vrot.lane.b32.xlu0 %v477, 32
    %v485 = vpop.permute.xlu0 %484
    %487 = vst.msk [vmem:[#allocation3] sm:$0x3] %vm396, %v485
    %v488 = vrot.slane %v477, 1
    %v489 = vperm.slane %v477, 0
    %v490 = vperm.slane %v488, 0
    %491 = vrot.lane.b32.xlu0 %v489, 32
    %v492 = vpop.permute.xlu0 %491
    %493 = vrot.lane.b32.xlu0 %v490, 32
    %v494 = vpop.permute.xlu0 %493
    %497 = vst.msk [vmem:[#allocation11 + $0x1] sm:$0x1] %vm412, %v492
    %498 = vst.msk [vmem:[#allocation11 + $0x9] sm:$0x1] %vm412, %v494
    %v499 = vld [vmem:[#allocation3] sm:$0x3]
    %v500 = vld [vmem:[#allocation4] sm:$0x3]
    %v501 = vpack.c.bf16 %v499, %v499
    %v502 = vld [vmem:[#allocation10] sm:$0xf]
    %v503 = vld [vmem:[#allocation10 + $0x4] sm:$0xf]
    %v504 = vld [vmem:[#allocation10 + $0x8] sm:$0xf]
    %v505 = vld [vmem:[#allocation10 + $0xc] sm:$0xf]
    %v510 = vunpack.c.l.b16 %v502
    %v511 = vunpack.c.l.b16 %v503
    %v512 = vunpack.c.l.b16 %v504
    %v513 = vunpack.c.l.b16 %v505
    %v514 = vpack.c.b16 %v511, %v510
    %v515 = vpack.c.b16 %v513, %v512
    %v519 = vsel %vm347, %v501, 0
    %521 = vmatpush.bf16.msra.mxu0 0
    %522 = vmatpush.bf16.msra.mxu0 0
    %523 = vmatpush.bf16.msra.mxu0 0
    %524 = vmatpush.bf16.msra.mxu0 0
    %525 = vmatpush.bf16.msra.mxu0 0
    %526 = vmatpush.bf16.msra.mxu0 0
    %527 = vmatpush.bf16.msra.mxu0 %v515
    %528 = vmatpush.bf16.msra.mxu0 %v514
    %529 = vmatmul.bf16.gmra.mxu0 %v519
    %v530 = vpop.f32.mrf.mxu0
    %v531 = vadd.f32 0.0, %v530
    %v532 = vpop.f32.mrf.mxu0
    %533 = vdwg.mxu0
    %v534 = vld [vmem:[%s166] sm:$0x3]
    %v535 = vadd.f32 %v534, %v531
    %v536 = vmul.f32 %v535, 0.5
    %v537 = vtanh.pop %v536
    %v538 = vmul.f32 %v537, 0.5
    %v539 = vadd.f32 %v538, 0.5
    %v540 = vtanh.pop %v535
    %542 = vrot.lane.b32.xlu0 %v500, 32
    %v543 = vpop.permute.xlu0 %542
    %v545 = vmul.f32 %v539, %v543
    %547 = vrot.lane.b32.xlu0 %v540, 64
    %v548 = vpop.permute.xlu0 %547
    %v550 = vmul.f32 %v539, %v548
    %552 = vrot.lane.b32.xlu0 %v550, 32
    %v553 = vpop.permute.xlu0 %552
    %v555 = vadd.f32 %v545, %v553
    %v556 = vtanh.pop %v555
    %558 = vrot.lane.b32.xlu0 %v556, 64
    %v559 = vpop.permute.xlu0 %558
    %v561 = vmul.f32 %v539, %v559
    %563 = vrot.lane.b32.xlu0 %v555, 96
    %v564 = vpop.permute.xlu0 %563
    %566 = vst.msk [vmem:[#allocation4] sm:$0x3] %vm396, %v564
    %568 = vrot.lane.b32.xlu0 %v561, 32
    %v569 = vpop.permute.xlu0 %568
    %571 = vst.msk [vmem:[#allocation3] sm:$0x3] %vm396, %v569
    %v572 = vrot.slane %v561, 1
    %v573 = vperm.slane %v561, 0
    %v574 = vperm.slane %v572, 0
    %575 = vrot.lane.b32.xlu0 %v573, 32
    %v576 = vpop.permute.xlu0 %575
    %577 = vrot.lane.b32.xlu0 %v574, 32
    %v578 = vpop.permute.xlu0 %577
    %581 = vst.msk [vmem:[#allocation11 + $0x2] sm:$0x1] %vm412, %v576
    %582 = vst.msk [vmem:[#allocation11 + $0xa] sm:$0x1] %vm412, %v578
    %v583 = vld [vmem:[#allocation3] sm:$0x3]
    %v584 = vld [vmem:[#allocation4] sm:$0x3]
    %v585 = vpack.c.bf16 %v583, %v583
    %v586 = vld [vmem:[#allocation10] sm:$0xf]
    %v587 = vld [vmem:[#allocation10 + $0x4] sm:$0xf]
    %v588 = vld [vmem:[#allocation10 + $0x8] sm:$0xf]
    %v589 = vld [vmem:[#allocation10 + $0xc] sm:$0xf]
    %v594 = vunpack.c.l.b16 %v586
    %v595 = vunpack.c.l.b16 %v587
    %v596 = vunpack.c.l.b16 %v588
    %v597 = vunpack.c.l.b16 %v589
    %v598 = vpack.c.b16 %v595, %v594
    %v599 = vpack.c.b16 %v597, %v596
    %v603 = vsel %vm347, %v585, 0
    %605 = vmatpush.bf16.msra.mxu0 0
    %606 = vmatpush.bf16.msra.mxu0 0
    %607 = vmatpush.bf16.msra.mxu0 0
    %608 = vmatpush.bf16.msra.mxu0 0
    %609 = vmatpush.bf16.msra.mxu0 0
    %610 = vmatpush.bf16.msra.mxu0 0
    %611 = vmatpush.bf16.msra.mxu0 %v599
    %612 = vmatpush.bf16.msra.mxu0 %v598
    %613 = vmatmul.bf16.gmra.mxu0 %v603
    %v614 = vpop.f32.mrf.mxu0
    %v615 = vadd.f32 0.0, %v614
    %v616 = vpop.f32.mrf.mxu0
    %617 = vdwg.mxu0
    %v618 = vld [vmem:[%s198] sm:$0x3]
    %v619 = vadd.f32 %v618, %v615
    %v620 = vmul.f32 %v619, 0.5
    %v621 = vtanh.pop %v620
    %v622 = vmul.f32 %v621, 0.5
    %v623 = vadd.f32 %v622, 0.5
    %v624 = vtanh.pop %v619
    %626 = vrot.lane.b32.xlu0 %v584, 32
    %v627 = vpop.permute.xlu0 %626
    %v629 = vmul.f32 %v623, %v627
    %631 = vrot.lane.b32.xlu0 %v624, 64
    %v632 = vpop.permute.xlu0 %631
    %v634 = vmul.f32 %v623, %v632
    %636 = vrot.lane.b32.xlu0 %v634, 32
    %v637 = vpop.permute.xlu0 %636
    %v639 = vadd.f32 %v629, %v637
    %v640 = vtanh.pop %v639
    %642 = vrot.lane.b32.xlu0 %v640, 64
    %v643 = vpop.permute.xlu0 %642
    %v645 = vmul.f32 %v623, %v643
    %647 = vrot.lane.b32.xlu0 %v639, 96
    %v648 = vpop.permute.xlu0 %647
    %650 = vst.msk [vmem:[#allocation4] sm:$0x3] %vm396, %v648
    %652 = vrot.lane.b32.xlu0 %v645, 32
    %v653 = vpop.permute.xlu0 %652
    %655 = vst.msk [vmem:[#allocation3] sm:$0x3] %vm396, %v653
    %v656 = vrot.slane %v645, 1
    %v657 = vperm.slane %v645, 0
    %v658 = vperm.slane %v656, 0
    %659 = vrot.lane.b32.xlu0 %v657, 32
    %v660 = vpop.permute.xlu0 %659
    %661 = vrot.lane.b32.xlu0 %v658, 32
    %v662 = vpop.permute.xlu0 %661
    %665 = vst.msk [vmem:[#allocation11 + $0x3] sm:$0x1] %vm412, %v660
    %666 = vst.msk [vmem:[#allocation11 + $0xb] sm:$0x1] %vm412, %v662
    %v667 = vld [vmem:[#allocation3] sm:$0x3]
    %v668 = vld [vmem:[#allocation4] sm:$0x3]
    %v669 = vpack.c.bf16 %v667, %v667
    %v670 = vld [vmem:[#allocation10] sm:$0xf]
    %v671 = vld [vmem:[#allocation10 + $0x4] sm:$0xf]
    %v672 = vld [vmem:[#allocation10 + $0x8] sm:$0xf]
    %v673 = vld [vmem:[#allocation10 + $0xc] sm:$0xf]
    %v678 = vunpack.c.l.b16 %v670
    %v679 = vunpack.c.l.b16 %v671
    %v680 = vunpack.c.l.b16 %v672
    %v681 = vunpack.c.l.b16 %v673
    %v682 = vpack.c.b16 %v679, %v678
    %v683 = vpack.c.b16 %v681, %v680
    %v687 = vsel %vm347, %v669, 0
    %689 = vmatpush.bf16.msra.mxu0 0
    %690 = vmatpush.bf16.msra.mxu0 0
    %691 = vmatpush.bf16.msra.mxu0 0
    %692 = vmatpush.bf16.msra.mxu0 0
    %693 = vmatpush.bf16.msra.mxu0 0
    %694 = vmatpush.bf16.msra.mxu0 0
    %695 = vmatpush.bf16.msra.mxu0 %v683
    %696 = vmatpush.bf16.msra.mxu0 %v682
    %697 = vmatmul.bf16.gmra.mxu0 %v687
    %v698 = vpop.f32.mrf.mxu0
    %v699 = vadd.f32 0.0, %v698
    %v700 = vpop.f32.mrf.mxu0
    %701 = vdwg.mxu0
    %v702 = vld [vmem:[%s230] sm:$0x3]
    %v703 = vadd.f32 %v702, %v699
    %v704 = vmul.f32 %v703, 0.5
    %v705 = vtanh.pop %v704
    %v706 = vmul.f32 %v705, 0.5
    %v707 = vadd.f32 %v706, 0.5
    %v708 = vtanh.pop %v703
    %710 = vrot.lane.b32.xlu0 %v668, 32
    %v711 = vpop.permute.xlu0 %710
    %v713 = vmul.f32 %v707, %v711
    %715 = vrot.lane.b32.xlu0 %v708, 64
    %v716 = vpop.permute.xlu0 %715
    %v718 = vmul.f32 %v707, %v716
    %720 = vrot.lane.b32.xlu0 %v718, 32
    %v721 = vpop.permute.xlu0 %720
    %v723 = vadd.f32 %v713, %v721
    %v724 = vtanh.pop %v723
    %726 = vrot.lane.b32.xlu0 %v724, 64
    %v727 = vpop.permute.xlu0 %726
    %v729 = vmul.f32 %v707, %v727
    %731 = vrot.lane.b32.xlu0 %v723, 96
    %v732 = vpop.permute.xlu0 %731
    %734 = vst.msk [vmem:[#allocation4] sm:$0x3] %vm396, %v732
    %736 = vrot.lane.b32.xlu0 %v729, 32
    %v737 = vpop.permute.xlu0 %736
    %739 = vst.msk [vmem:[#allocation3] sm:$0x3] %vm396, %v737
    %v740 = vrot.slane %v729, 1
    %v741 = vperm.slane %v729, 0
    %v742 = vperm.slane %v740, 0
    %743 = vrot.lane.b32.xlu0 %v741, 32
    %v744 = vpop.permute.xlu0 %743
    %745 = vrot.lane.b32.xlu0 %v742, 32
    %v746 = vpop.permute.xlu0 %745
    %749 = vst.msk [vmem:[#allocation11 + $0x4] sm:$0x1] %vm412, %v744
    %750 = vst.msk [vmem:[#allocation11 + $0xc] sm:$0x1] %vm412, %v746
    %v751 = vld [vmem:[#allocation3] sm:$0x3]
    %v752 = vld [vmem:[#allocation4] sm:$0x3]
    %v753 = vpack.c.bf16 %v751, %v751
    %v754 = vld [vmem:[#allocation10] sm:$0xf]
    %v755 = vld [vmem:[#allocation10 + $0x4] sm:$0xf]
    %v756 = vld [vmem:[#allocation10 + $0x8] sm:$0xf]
    %v757 = vld [vmem:[#allocation10 + $0xc] sm:$0xf]
    %v762 = vunpack.c.l.b16 %v754
    %v763 = vunpack.c.l.b16 %v755
    %v764 = vunpack.c.l.b16 %v756
    %v765 = vunpack.c.l.b16 %v757
    %v766 = vpack.c.b16 %v763, %v762
    %v767 = vpack.c.b16 %v765, %v764
    %v771 = vsel %vm347, %v753, 0
    %773 = vmatpush.bf16.msra.mxu0 0
    %774 = vmatpush.bf16.msra.mxu0 0
    %775 = vmatpush.bf16.msra.mxu0 0
    %776 = vmatpush.bf16.msra.mxu0 0
    %777 = vmatpush.bf16.msra.mxu0 0
    %778 = vmatpush.bf16.msra.mxu0 0
    %779 = vmatpush.bf16.msra.mxu0 %v767
    %780 = vmatpush.bf16.msra.mxu0 %v766
    %781 = vmatmul.bf16.gmra.mxu0 %v771
    %v782 = vpop.f32.mrf.mxu0
    %v783 = vadd.f32 0.0, %v782
    %v784 = vpop.f32.mrf.mxu0
    %785 = vdwg.mxu0
    %v786 = vld [vmem:[%s262] sm:$0x3]
    %v787 = vadd.f32 %v786, %v783
    %v788 = vmul.f32 %v787, 0.5
    %v789 = vtanh.pop %v788
    %v790 = vmul.f32 %v789, 0.5
    %v791 = vadd.f32 %v790, 0.5
    %v792 = vtanh.pop %v787
    %794 = vrot.lane.b32.xlu0 %v752, 32
    %v795 = vpop.permute.xlu0 %794
    %v797 = vmul.f32 %v791, %v795
    %799 = vrot.lane.b32.xlu0 %v792, 64
    %v800 = vpop.permute.xlu0 %799
    %v802 = vmul.f32 %v791, %v800
    %804 = vrot.lane.b32.xlu0 %v802, 32
    %v805 = vpop.permute.xlu0 %804
    %v807 = vadd.f32 %v797, %v805
    %v808 = vtanh.pop %v807
    %810 = vrot.lane.b32.xlu0 %v808, 64
    %v811 = vpop.permute.xlu0 %810
    %v813 = vmul.f32 %v791, %v811
    %815 = vrot.lane.b32.xlu0 %v807, 96
    %v816 = vpop.permute.xlu0 %815
    %818 = vst.msk [vmem:[#allocation4] sm:$0x3] %vm396, %v816
    %820 = vrot.lane.b32.xlu0 %v813, 32
    %v821 = vpop.permute.xlu0 %820
    %823 = vst.msk [vmem:[#allocation3] sm:$0x3] %vm396, %v821
    %v824 = vrot.slane %v813, 1
    %v825 = vperm.slane %v813, 0
    %v826 = vperm.slane %v824, 0
    %827 = vrot.lane.b32.xlu0 %v825, 32
    %v828 = vpop.permute.xlu0 %827
    %829 = vrot.lane.b32.xlu0 %v826, 32
    %v830 = vpop.permute.xlu0 %829
    %833 = vst.msk [vmem:[#allocation11 + $0x5] sm:$0x1] %vm412, %v828
    %834 = vst.msk [vmem:[#allocation11 + $0xd] sm:$0x1] %vm412, %v830
    %v835 = vld [vmem:[#allocation3] sm:$0x3]
    %v836 = vld [vmem:[#allocation4] sm:$0x3]
    %v837 = vpack.c.bf16 %v835, %v835
    %v838 = vld [vmem:[#allocation10] sm:$0xf]
    %v839 = vld [vmem:[#allocation10 + $0x4] sm:$0xf]
    %v840 = vld [vmem:[#allocation10 + $0x8] sm:$0xf]
    %v841 = vld [vmem:[#allocation10 + $0xc] sm:$0xf]
    %v846 = vunpack.c.l.b16 %v838
    %v847 = vunpack.c.l.b16 %v839
    %v848 = vunpack.c.l.b16 %v840
    %v849 = vunpack.c.l.b16 %v841
    %v850 = vpack.c.b16 %v847, %v846
    %v851 = vpack.c.b16 %v849, %v848
    %v855 = vsel %vm347, %v837, 0
    %857 = vmatpush.bf16.msra.mxu0 0
    %858 = vmatpush.bf16.msra.mxu0 0
    %859 = vmatpush.bf16.msra.mxu0 0
    %860 = vmatpush.bf16.msra.mxu0 0
    %861 = vmatpush.bf16.msra.mxu0 0
    %862 = vmatpush.bf16.msra.mxu0 0
    %863 = vmatpush.bf16.msra.mxu0 %v851
    %864 = vmatpush.bf16.msra.mxu0 %v850
    %865 = vmatmul.bf16.gmra.mxu0 %v855
    %v866 = vpop.f32.mrf.mxu0
    %v867 = vadd.f32 0.0, %v866
    %v868 = vpop.f32.mrf.mxu0
    %869 = vdwg.mxu0
    %v870 = vld [vmem:[%s294] sm:$0x3]
    %v871 = vadd.f32 %v870, %v867
    %v872 = vmul.f32 %v871, 0.5
    %v873 = vtanh.pop %v872
    %v874 = vmul.f32 %v873, 0.5
    %v875 = vadd.f32 %v874, 0.5
    %v876 = vtanh.pop %v871
    %878 = vrot.lane.b32.xlu0 %v836, 32
    %v879 = vpop.permute.xlu0 %878
    %v881 = vmul.f32 %v875, %v879
    %883 = vrot.lane.b32.xlu0 %v876, 64
    %v884 = vpop.permute.xlu0 %883
    %v886 = vmul.f32 %v875, %v884
    %888 = vrot.lane.b32.xlu0 %v886, 32
    %v889 = vpop.permute.xlu0 %888
    %v891 = vadd.f32 %v881, %v889
    %v892 = vtanh.pop %v891
    %894 = vrot.lane.b32.xlu0 %v892, 64
    %v895 = vpop.permute.xlu0 %894
    %v897 = vmul.f32 %v875, %v895
    %899 = vrot.lane.b32.xlu0 %v891, 96
    %v900 = vpop.permute.xlu0 %899
    %902 = vst.msk [vmem:[#allocation4] sm:$0x3] %vm396, %v900
    %904 = vrot.lane.b32.xlu0 %v897, 32
    %v905 = vpop.permute.xlu0 %904
    %907 = vst.msk [vmem:[#allocation3] sm:$0x3] %vm396, %v905
    %v908 = vrot.slane %v897, 1
    %v909 = vperm.slane %v897, 0
    %v910 = vperm.slane %v908, 0
    %911 = vrot.lane.b32.xlu0 %v909, 32
    %v912 = vpop.permute.xlu0 %911
    %913 = vrot.lane.b32.xlu0 %v910, 32
    %v914 = vpop.permute.xlu0 %913
    %917 = vst.msk [vmem:[#allocation11 + $0x6] sm:$0x1] %vm412, %v912
    %918 = vst.msk [vmem:[#allocation11 + $0xe] sm:$0x1] %vm412, %v914
    %v919 = vld [vmem:[#allocation3] sm:$0x3]
    %v920 = vld [vmem:[#allocation4] sm:$0x3]
    %v921 = vpack.c.bf16 %v919, %v919
    %v922 = vld [vmem:[#allocation10] sm:$0xf]
    %v923 = vld [vmem:[#allocation10 + $0x4] sm:$0xf]
    %v924 = vld [vmem:[#allocation10 + $0x8] sm:$0xf]
    %v925 = vld [vmem:[#allocation10 + $0xc] sm:$0xf]
    %v930 = vunpack.c.l.b16 %v922
    %v931 = vunpack.c.l.b16 %v923
    %v932 = vunpack.c.l.b16 %v924
    %v933 = vunpack.c.l.b16 %v925
    %v934 = vpack.c.b16 %v931, %v930
    %v935 = vpack.c.b16 %v933, %v932
    %v939 = vsel %vm347, %v921, 0
    %941 = vmatpush.bf16.msra.mxu0 0
    %942 = vmatpush.bf16.msra.mxu0 0
    %943 = vmatpush.bf16.msra.mxu0 0
    %944 = vmatpush.bf16.msra.mxu0 0
    %945 = vmatpush.bf16.msra.mxu0 0
    %946 = vmatpush.bf16.msra.mxu0 0
    %947 = vmatpush.bf16.msra.mxu0 %v935
    %948 = vmatpush.bf16.msra.mxu0 %v934
    %949 = vmatmul.bf16.gmra.mxu0 %v939
    %v950 = vpop.f32.mrf.mxu0
    %v951 = vadd.f32 0.0, %v950
    %v952 = vpop.f32.mrf.mxu0
    %953 = vdwg.mxu0
    %v954 = vld [vmem:[%s326] sm:$0x3]
    %v955 = vadd.f32 %v954, %v951
    %v956 = vmul.f32 %v955, 0.5
    %v957 = vtanh.pop %v956
    %v958 = vmul.f32 %v957, 0.5
    %v959 = vadd.f32 %v958, 0.5
    %v960 = vtanh.pop %v955
    %962 = vrot.lane.b32.xlu0 %v920, 32
    %v963 = vpop.permute.xlu0 %962
    %v965 = vmul.f32 %v959, %v963
    %967 = vrot.lane.b32.xlu0 %v960, 64
    %v968 = vpop.permute.xlu0 %967
    %v970 = vmul.f32 %v959, %v968
    %972 = vrot.lane.b32.xlu0 %v970, 32
    %v973 = vpop.permute.xlu0 %972
    %v975 = vadd.f32 %v965, %v973
    %v976 = vtanh.pop %v975
    %978 = vrot.lane.b32.xlu0 %v976, 64
    %v979 = vpop.permute.xlu0 %978
    %v981 = vmul.f32 %v959, %v979
    %983 = vrot.lane.b32.xlu0 %v975, 96
    %v984 = vpop.permute.xlu0 %983
    %986 = vst.msk [vmem:[#allocation4] sm:$0x3] %vm396, %v984
    %988 = vrot.lane.b32.xlu0 %v981, 32
    %v989 = vpop.permute.xlu0 %988
    %991 = vst.msk [vmem:[#allocation3] sm:$0x3] %vm396, %v989
    %v992 = vrot.slane %v981, 1
    %v993 = vperm.slane %v981, 0
    %v994 = vperm.slane %v992, 0
    %995 = vrot.lane.b32.xlu0 %v993, 32
    %v996 = vpop.permute.xlu0 %995
    %997 = vrot.lane.b32.xlu0 %v994, 32
    %v998 = vpop.permute.xlu0 %997
    %1001 = vst.msk [vmem:[#allocation11 + $0x7] sm:$0x1] %vm412, %v996
    %1002 = vst.msk [vmem:[#allocation11 + $0xf] sm:$0x1] %vm412, %v998
    // Predicated region
    $region34: #{tpu_custom_call.1} parent=1 // pred_check
      _
    $region35: #{tpu_custom_call.1} parent=1 // pred_check_branch
      %1004 = sbr.rel (0) target = $region37
    $region36: #{tpu_custom_call.1} parent=1 // pred_region
      %1006 = vsyncadd [#allocation7], 0
      %s1007 = sshll.u32 [#allocation11], 4
      %s1008 = int_to_ptr.vmem [resolvable:$true] %s1007
      %s1009 = sshll.u32 %s4, 4
      %s1010 = int_to_ptr.hbm [resolvable:$true] %s1009
      %1015 = dma.vmem_to_hbm [thread:$0]  %s1008, 256, %s1010, [#allocation7], 128, 128, 8
    $region37: #{tpu_custom_call.1} parent=1 // pred_fallthru
      _
    // Predicated region
    $region38: #{tpu_custom_call.1} parent=1 // pred_check
      _
    $region39: #{tpu_custom_call.1} parent=1 // pred_check_branch
      %1017 = sbr.rel (0) target = $region41
    $region40: #{tpu_custom_call.1} parent=1 // pred_region
      %1019 = dma.done [#allocation7], 256
    $region41: #{tpu_custom_call.1} parent=1 // pred_fallthru
      _
    %1020 = vsyncpa [#allocation6], 1
    %1021 = vsyncpa [#allocation9], 1
    %1022 = vsyncpa [#allocation7], 1

</llo_original>
